<compile_context>
chip_gen: v7x
topology: tpu7x:2x2x1
jax: 0.10.0
libtpu: 0.0.40
codegen_flags: <defaults>
</compile_context>

<pallas_src>
import functools
import math

import numpy as np
import jax
import jax.numpy as jnp
from jax.experimental import pallas as pl
from jax.experimental.pallas import tpu as pltpu

HIDDEN = 32        # d_model
HEADS = 4          # nhead
LAYERS = 2         # num_layers
FFN = 2048         # nn.TransformerEncoderLayer default dim_feedforward
SEQ = 8
BATCH = 2
EPS = 1e-5         # LayerNorm default eps
MAX_LEN = 5000
NEG_INF = -1e30    # finite mask value (avoids NaN from exp(-inf - -inf))

# rows of the packed per-layer small-vector tensor (L, VEC_ROWS, D)
_BQ, _BK, _BV, _BO, _LN1W, _LN1B, _LN2W, _LN2B, _B2 = range(9)
VEC_ROWS = 16


# ----------------------------- in-kernel helpers -----------------------------

def _layer_norm(v, w, b):
    inv_d = 1.0 / v.shape[-1]
    mu = jnp.sum(v, axis=-1, keepdims=True) * inv_d
    c = v - mu
    var = jnp.sum(c * c, axis=-1, keepdims=True) * inv_d
    return c * jax.lax.rsqrt(var + EPS) * w + b


# ----------------------------- fused kernel -----------------------------

def _fused_kernel(x_ref, mask_ref, bias_ref,
                  wqkv_ref, wo_ref, vec_ref, w1_ref, b1_ref, w2_ref,
                  o_ref, *, num_heads):
    """grid=(LAYERS,).  o_ref (constant block index) carries the token state
    across layers; per-layer weights arrive via their index_map (prefetched)."""
    n, d = o_ref.shape
    hd = d // num_heads
    scale = 1.0 / math.sqrt(hd)
    layer = pl.program_id(0)

    # layer 0 only: initialize the resident carry from the (pe-added) tokens.
    @pl.when(layer == 0)
    def _():
        o_ref[...] = x_ref[...]

    x = o_ref[...]                                    # (N, D) f32
    vec = vec_ref[...]                                # (VEC_ROWS, D) packed vectors

    # ---- fused QKV projection: one MXU push filling 96/128 output lanes ----
    qkv = jnp.dot(x, wqkv_ref[...], preferred_element_type=jnp.float32)   # (N, 3D)
    q = qkv[:, 0:d]       + vec[_BQ:_BQ + 1, :]
    k = qkv[:, d:2 * d]   + vec[_BK:_BK + 1, :]
    v = qkv[:, 2 * d:3 * d] + vec[_BV:_BV + 1, :]

    # ---- all heads in one shot: stack masked Q copies along sublanes ----
    # mask_ref[r, l] = 1 iff lane l belongs to head (r // n)
    mask = mask_ref[...]                              # (H*N, D) f32 0/1
    q_stack = jnp.concatenate([q] * num_heads, axis=0) * mask     # (H*N, D)

    # one QK^T (contraction over lanes; non-head lanes of q_stack are zero)
    s = jax.lax.dot_general(q_stack, k, (((1,), (1,)), ((), ())),
                            preferred_element_type=jnp.float32)   # (H*N, N)
    s = s * scale + bias_ref[...]                     # block-diagonal batch mask
    # one softmax for all heads
    s = s - jnp.max(s, axis=-1, keepdims=True)
    p = jnp.exp(s)
    p = p * pl.reciprocal(jnp.sum(p, axis=-1, keepdims=True), approx=True)

    # one P@V; keep head-h lanes from head block h, fold blocks back together
    o_stack = jnp.dot(p, v, preferred_element_type=jnp.float32) * mask    # (H*N, D)
    attn = o_stack[0:n, :]
    for h in range(1, num_heads):
        attn = attn + o_stack[h * n:(h + 1) * n, :]

    attn = jnp.dot(attn, wo_ref[...], preferred_element_type=jnp.float32) \
        + vec[_BO:_BO + 1, :]

    # ---- residual + LayerNorm1 (f32) ----
    y = _layer_norm(x + attn, vec[_LN1W:_LN1W + 1, :], vec[_LN1B:_LN1B + 1, :])

    # ---- feed-forward: bf16 weights / bf16 MXU operands, f32 accumulate.
    # bias + ReLU + bf16 cast fused so only the bf16 intermediate stays live. ----
    h1 = jnp.dot(y.astype(jnp.bfloat16), w1_ref[...],
                 preferred_element_type=jnp.float32)              # (N, F) f32
    h1 = jnp.maximum(h1 + b1_ref[...], 0.0).astype(jnp.bfloat16)  # (N, F) bf16
    h2 = jnp.dot(h1, w2_ref[...],
                 preferred_element_type=jnp.float32) + vec[_B2:_B2 + 1, :]

    # ---- residual + LayerNorm2 ----
    o_ref[...] = _layer_norm(y + h2, vec[_LN2W:_LN2W + 1, :], vec[_LN2B:_LN2B + 1, :])


# ----------------------------- wrapper -----------------------------

def simple_transformer_forward(x, params, pe, *, num_heads):
    # x: (S, B, D)  — PyTorch nn.Transformer default layout (batch_first=False)
    S, B, D = x.shape
    N = S * B
    H = num_heads
    HD = D // H
    L = params["wqkv"].shape[0]
    F = params["w1"].shape[-1]

    # Positional add folded into the wrapper.  PyTorch quirk: pe[:, :x.size(1)]
    # indexes the pe row by the *batch* coordinate, broadcast over seq.
    x_tok = (x + pe[None, :B, :]).reshape(N, D)      # seq-major tokens, t = s*B + b

    # Static attention constants (trace-time, baked as constants):
    rows = np.arange(H * N)
    lanes = np.arange(D)
    cols = np.arange(N)
    # head-lane selector for head block r // N
    mask_stack = (lanes[None, :] // HD == rows[:, None] // N).astype(np.float32)
    # block-diagonal batch mask (tokens attend only within their batch element)
    bias_stack = np.where((rows[:, None] % B) == (cols[None, :] % B),
                          0.0, NEG_INF).astype(np.float32)

    def wspec(*dims):
        # stacked (L, *dims) weight: squeeze the layer axis, select layer l.
        return pl.BlockSpec((None,) + dims, lambda l: (l,) + (0,) * len(dims))

    in_specs = [
        pl.BlockSpec((N, D), lambda l: (0, 0)),           # tokens (+pe), fetched once
        pl.BlockSpec((H * N, D), lambda l: (0, 0)),       # head-lane mask stack
        pl.BlockSpec((H * N, N), lambda l: (0, 0)),       # attention bias stack
        wspec(D, 3 * D),                                  # wqkv
        wspec(D, D),                                      # wo
        wspec(VEC_ROWS, D),                               # packed small vectors
        wspec(D, F),                                      # w1 (bf16)
        wspec(1, F),                                      # b1
        wspec(F, D),                                      # w2 (bf16)
    ]

    kernel = functools.partial(_fused_kernel, num_heads=num_heads)
    out = pl.pallas_call(
        kernel,
        grid=(L,),
        in_specs=in_specs,
        out_specs=pl.BlockSpec((N, D), lambda l: (0, 0)),  # VMEM-resident carry
        out_shape=jax.ShapeDtypeStruct((N, D), jnp.float32),
        compiler_params=pltpu.CompilerParams(
            dimension_semantics=("arbitrary",)),
    )(x_tok, jnp.asarray(mask_stack), jnp.asarray(bias_stack),
      params["wqkv"], params["wo"], params["vec"],
      params["w1"], params["b1"], params["w2"])

    return out.reshape(S, B, D)


# ----------------------------- parameter setup -----------------------------

def make_positional_encoding(d_model, max_len=MAX_LEN):
    position = np.arange(max_len, dtype=np.float32)[:, None]
    div_term = np.exp(np.arange(0, d_model, 2, dtype=np.float32)
                      * -(np.log(10000.0) / d_model))
    pe = np.zeros((max_len, d_model), dtype=np.float32)
    pe[:, 0::2] = np.sin(position * div_term)
    pe[:, 1::2] = np.cos(position * div_term)
    return jnp.asarray(pe)                                           # (max_len, D)


def init_params(key, d_model, layers, ffn):
    """Deterministic synthetic weights with PyTorch Linear semantics, re-laid out
    for the kernel: transposed to (in, out), QKV fused to (D, 3D), small vectors
    packed into one (VEC_ROWS, D) slab, stacked with a leading layer axis,
    FFN weights compressed to bf16."""
    def dense(k, out_dim, in_dim):
        kw, kb = jax.random.split(k)
        bound = 1.0 / math.sqrt(in_dim)
        w = jax.random.uniform(kw, (out_dim, in_dim), jnp.float32, -bound, bound)
        b = jax.random.uniform(kb, (out_dim,), jnp.float32, -bound, bound)
        return w, b

    per_layer = []
    for lk in jax.random.split(key, layers):
        k1, k2, k3, k4 = jax.random.split(lk, 4)
        in_w, in_b = dense(k1, 3 * d_model, d_model)     # (3D, D), (3D,)
        wo, bo = dense(k2, d_model, d_model)
        w1, b1 = dense(k3, ffn, d_model)
        w2, b2 = dense(k4, d_model, ffn)

        vec = jnp.zeros((VEC_ROWS, d_model), jnp.float32)
        vec = vec.at[_BQ].set(in_b[0 * d_model:1 * d_model])
        vec = vec.at[_BK].set(in_b[1 * d_model:2 * d_model])
        vec = vec.at[_BV].set(in_b[2 * d_model:3 * d_model])
        vec = vec.at[_BO].set(bo)
        vec = vec.at[_LN1W].set(1.0)
        vec = vec.at[_LN2W].set(1.0)
        vec = vec.at[_B2].set(b2)

        per_layer.append(dict(
            wqkv=in_w.T,                 # (D, 3D); columns [q | k | v]
            wo=wo.T,                     # (D, D)
            vec=vec,                     # (VEC_ROWS, D)
            w1=w1.T, b1=b1[None, :],     # (D, F), (1, F)
            w2=w2.T,                     # (F, D)
        ))
    stacked = {k: jnp.stack([p[k] for p in per_layer], axis=0) for k in per_layer[0]}
    stacked["w1"] = stacked["w1"].astype(jnp.bfloat16)   # halve FFN weight DMA
    stacked["w2"] = stacked["w2"].astype(jnp.bfloat16)
    return stacked


# ----------------------------- main -----------------------------

if __name__ == "__main__":
    key = jax.random.PRNGKey(0)
    kx, kp = jax.random.split(key)

    x = jax.random.normal(kx, (SEQ, BATCH, HIDDEN), jnp.float32)
    params = init_params(kp, HIDDEN, LAYERS, FFN)
    pe = make_positional_encoding(HIDDEN)

    fwd = jax.jit(functools.partial(simple_transformer_forward, num_heads=HEADS))
    y = jax.block_until_ready(fwd(x, params, pe))

    assert y.shape == (SEQ, BATCH, HIDDEN)
    assert bool(jnp.all(jnp.isfinite(y)))
    print("KERNEL_OK")
</pallas_src>

<mosaic_0001>
module attributes {stable_mosaic.version = 11 : i64} {
  func.func @_fused_kernel(%arg0: i32, %arg1: memref<16x32xf32, #tpu.memory_space<vmem>>, %arg2: memref<64x32xf32, #tpu.memory_space<vmem>>, %arg3: memref<64x16xf32, #tpu.memory_space<vmem>>, %arg4: memref<1x32x96xf32, #tpu.memory_space<vmem>>, %arg5: memref<1x32x32xf32, #tpu.memory_space<vmem>>, %arg6: memref<1x16x32xf32, #tpu.memory_space<vmem>>, %arg7: memref<1x32x2048xbf16, #tpu.memory_space<vmem>>, %arg8: memref<1x1x2048xf32, #tpu.memory_space<vmem>>, %arg9: memref<1x2048x32xbf16, #tpu.memory_space<vmem>>, %arg10: memref<16x32xf32, #tpu.memory_space<vmem>>) attributes {dimension_semantics = [#tpu.dimension_semantics<arbitrary>], iteration_bounds = array<i64: 2>, scalar_prefetch = 0 : i64, scratch_operands = 0 : i64, tpu.core_type = #tpu.core_type<tc>, window_params = [{pipeline_mode = #tpu.pipeline_mode<synchronous>, transform_indices = @transform_0, window_bounds = array<i64: 16, 32>}, {pipeline_mode = #tpu.pipeline_mode<synchronous>, transform_indices = @transform_1, window_bounds = array<i64: 64, 32>}, {pipeline_mode = #tpu.pipeline_mode<synchronous>, transform_indices = @transform_2, window_bounds = array<i64: 64, 16>}, {transform_indices = @transform_3, window_bounds = array<i64: 1, 32, 96>}, {transform_indices = @transform_4, window_bounds = array<i64: 1, 32, 32>}, {transform_indices = @transform_5, window_bounds = array<i64: 1, 16, 32>}, {transform_indices = @transform_6, window_bounds = array<i64: 1, 32, 2048>}, {transform_indices = @transform_7, window_bounds = array<i64: 1, 1, 2048>}, {transform_indices = @transform_8, window_bounds = array<i64: 1, 2048, 32>}, {pipeline_mode = #tpu.pipeline_mode<synchronous>, transform_indices = @transform_9, window_bounds = array<i64: 16, 32>}]} {
    %c0_i32 = arith.constant 0 : i32
    %0 = arith.cmpi eq, %arg0, %c0_i32 : i32
    %1 = arith.extui %0 : i1 to i32
    %c0_i32_0 = arith.constant 0 : i32
    %2 = arith.cmpi ne, %1, %c0_i32_0 : i32
    scf.if %2 {
      %c0_45 = arith.constant 0 : index
      %c0_46 = arith.constant 0 : index
      %118 = vector.load %arg1[%c0_45, %c0_46] : memref<16x32xf32, #tpu.memory_space<vmem>>, vector<16x32xf32>
      %c0_47 = arith.constant 0 : index
      %c0_48 = arith.constant 0 : index
      %119 = vector.load %arg10[%c0_47, %c0_48] : memref<16x32xf32, #tpu.memory_space<vmem>>, vector<16x32xf32>
      tpu.vector_store %arg10[%c0_47, %c0_48], %118 {strides = array<i32>} : memref<16x32xf32, #tpu.memory_space<vmem>>, vector<16x32xf32>,
    } else {
    }
    %c0 = arith.constant 0 : index
    %c0_1 = arith.constant 0 : index
    %3 = vector.load %arg10[%c0, %c0_1] : memref<16x32xf32, #tpu.memory_space<vmem>>, vector<16x32xf32>
    %c0_2 = arith.constant 0 : index
    %c0_3 = arith.constant 0 : index
    %c0_4 = arith.constant 0 : index
    %4 = vector.load %arg6[%c0_2, %c0_3, %c0_4] : memref<1x16x32xf32, #tpu.memory_space<vmem>>, vector<1x16x32xf32>
    %5 = vector.shape_cast %4 : vector<1x16x32xf32> to vector<16x32xf32>
    %c0_5 = arith.constant 0 : index
    %c0_6 = arith.constant 0 : index
    %c0_7 = arith.constant 0 : index
    %6 = vector.load %arg4[%c0_5, %c0_6, %c0_7] : memref<1x32x96xf32, #tpu.memory_space<vmem>>, vector<1x32x96xf32>
    %7 = vector.shape_cast %6 : vector<1x32x96xf32> to vector<32x96xf32>
    %cst = arith.constant dense<0.000000e+00> : vector<16x96xf32>
    %8 = tpu.matmul %3, %7, %cst {dimension_numbers = #tpu.dot_dimension_numbers<[1], [0], [0], [1], [0, 0, 1, 1], [], []>} : vector<16x32xf32>, vector<32x96xf32>, vector<16x96xf32> -> vector<16x96xf32>
    %9 = vector.extract_strided_slice %8 {offsets = [0, 0], sizes = [16, 32], strides = [1, 1]} : vector<16x96xf32> to vector<16x32xf32>
    %10 = vector.extract_strided_slice %5 {offsets = [0, 0], sizes = [1, 32], strides = [1, 1]} : vector<16x32xf32> to vector<1x32xf32>
    %11 = vector.broadcast %10 : vector<1x32xf32> to vector<16x32xf32>
    %12 = arith.addf %9, %11 : vector<16x32xf32>
    %13 = vector.extract_strided_slice %8 {offsets = [0, 32], sizes = [16, 32], strides = [1, 1]} : vector<16x96xf32> to vector<16x32xf32>
    %14 = vector.extract_strided_slice %5 {offsets = [1, 0], sizes = [1, 32], strides = [1, 1]} : vector<16x32xf32> to vector<1x32xf32>
    %15 = vector.broadcast %14 : vector<1x32xf32> to vector<16x32xf32>
    %16 = arith.addf %13, %15 : vector<16x32xf32>
    %17 = vector.extract_strided_slice %8 {offsets = [0, 64], sizes = [16, 32], strides = [1, 1]} : vector<16x96xf32> to vector<16x32xf32>
    %18 = vector.extract_strided_slice %5 {offsets = [2, 0], sizes = [1, 32], strides = [1, 1]} : vector<16x32xf32> to vector<1x32xf32>
    %19 = vector.broadcast %18 : vector<1x32xf32> to vector<16x32xf32>
    %20 = arith.addf %17, %19 : vector<16x32xf32>
    %c0_8 = arith.constant 0 : index
    %c0_9 = arith.constant 0 : index
    %21 = vector.load %arg2[%c0_8, %c0_9] : memref<64x32xf32, #tpu.memory_space<vmem>>, vector<64x32xf32>
    %22 = tpu.concatenate %12, %12, %12, %12 in 0 : vector<16x32xf32>, vector<16x32xf32>, vector<16x32xf32>, vector<16x32xf32> -> vector<64x32xf32>
    %23 = arith.mulf %22, %21 : vector<64x32xf32>
    %cst_10 = arith.constant dense<0.000000e+00> : vector<64x16xf32>
    %24 = tpu.matmul %23, %16, %cst_10 {dimension_numbers = #tpu.dot_dimension_numbers<[1], [1], [0], [0], [0, 0, 1, 0], [], []>} : vector<64x32xf32>, vector<16x32xf32>, vector<64x16xf32> -> vector<64x16xf32>
    %cst_11 = arith.constant 0.353553385 : f32
    %25 = vector.broadcast %cst_11 : f32 to vector<64x16xf32>
    %26 = arith.mulf %24, %25 : vector<64x16xf32>
    %c0_12 = arith.constant 0 : index
    %c0_13 = arith.constant 0 : index
    %27 = vector.load %arg3[%c0_12, %c0_13] : memref<64x16xf32, #tpu.memory_space<vmem>>, vector<64x16xf32>
    %28 = arith.addf %26, %27 : vector<64x16xf32>
    %cst_14 = arith.constant dense<0xFF800000> : vector<64xf32>
    %29 = vector.multi_reduction <maximumf>, %28, %cst_14 [1] : vector<64x16xf32> to vector<64xf32>
    %30 = vector.shape_cast %29 : vector<64xf32> to vector<64x1xf32>
    %31 = vector.broadcast %30 : vector<64x1xf32> to vector<64x16xf32>
    %32 = arith.subf %28, %31 : vector<64x16xf32>
    %33 = math.exp %32 : vector<64x16xf32>
    %cst_15 = arith.constant dense<0.000000e+00> : vector<64xf32>
    %34 = vector.multi_reduction <add>, %33, %cst_15 [1] : vector<64x16xf32> to vector<64xf32>
    %35 = vector.shape_cast %34 : vector<64xf32> to vector<64x1xf32>
    %36 = tpu.reciprocal %35 {approx = true} : vector<64x1xf32> -> vector<64x1xf32>
    %37 = vector.broadcast %36 : vector<64x1xf32> to vector<64x16xf32>
    %38 = arith.mulf %33, %37 : vector<64x16xf32>
    %cst_16 = arith.constant dense<0.000000e+00> : vector<64x32xf32>
    %39 = tpu.matmul %38, %20, %cst_16 {dimension_numbers = #tpu.dot_dimension_numbers<[1], [0], [0], [1], [0, 0, 1, 1], [], []>} : vector<64x16xf32>, vector<16x32xf32>, vector<64x32xf32> -> vector<64x32xf32>
    %40 = arith.mulf %39, %21 : vector<64x32xf32>
    %41 = vector.extract_strided_slice %40 {offsets = [0, 0], sizes = [16, 32], strides = [1, 1]} : vector<64x32xf32> to vector<16x32xf32>
    %42 = vector.extract_strided_slice %40 {offsets = [16, 0], sizes = [16, 32], strides = [1, 1]} : vector<64x32xf32> to vector<16x32xf32>
    %43 = arith.addf %41, %42 : vector<16x32xf32>
    %44 = vector.extract_strided_slice %40 {offsets = [32, 0], sizes = [16, 32], strides = [1, 1]} : vector<64x32xf32> to vector<16x32xf32>
    %45 = arith.addf %43, %44 : vector<16x32xf32>
    %46 = vector.extract_strided_slice %40 {offsets = [48, 0], sizes = [16, 32], strides = [1, 1]} : vector<64x32xf32> to vector<16x32xf32>
    %47 = arith.addf %45, %46 : vector<16x32xf32>
    %c0_17 = arith.constant 0 : index
    %c0_18 = arith.constant 0 : index
    %c0_19 = arith.constant 0 : index
    %48 = vector.load %arg5[%c0_17, %c0_18, %c0_19] : memref<1x32x32xf32, #tpu.memory_space<vmem>>, vector<1x32x32xf32>
    %49 = vector.shape_cast %48 : vector<1x32x32xf32> to vector<32x32xf32>
    %cst_20 = arith.constant dense<0.000000e+00> : vector<16x32xf32>
    %50 = tpu.matmul %47, %49, %cst_20 {dimension_numbers = #tpu.dot_dimension_numbers<[1], [0], [0], [1], [0, 0, 1, 1], [], []>} : vector<16x32xf32>, vector<32x32xf32>, vector<16x32xf32> -> vector<16x32xf32>
    %51 = vector.extract_strided_slice %5 {offsets = [3, 0], sizes = [1, 32], strides = [1, 1]} : vector<16x32xf32> to vector<1x32xf32>
    %52 = vector.broadcast %51 : vector<1x32xf32> to vector<16x32xf32>
    %53 = arith.addf %50, %52 : vector<16x32xf32>
    %54 = arith.addf %3, %53 : vector<16x32xf32>
    %55 = vector.extract_strided_slice %5 {offsets = [4, 0], sizes = [1, 32], strides = [1, 1]} : vector<16x32xf32> to vector<1x32xf32>
    %56 = vector.extract_strided_slice %5 {offsets = [5, 0], sizes = [1, 32], strides = [1, 1]} : vector<16x32xf32> to vector<1x32xf32>
    %cst_21 = arith.constant dense<0.000000e+00> : vector<16xf32>
    %57 = vector.multi_reduction <add>, %54, %cst_21 [1] : vector<16x32xf32> to vector<16xf32>
    %58 = vector.shape_cast %57 : vector<16xf32> to vector<16x1xf32>
    %cst_22 = arith.constant 3.125000e-02 : f32
    %59 = vector.broadcast %cst_22 : f32 to vector<16x1xf32>
    %60 = arith.mulf %58, %59 : vector<16x1xf32>
    %61 = vector.broadcast %60 : vector<16x1xf32> to vector<16x32xf32>
    %62 = arith.subf %54, %61 : vector<16x32xf32>
    %63 = arith.mulf %62, %62 : vector<16x32xf32>
    %cst_23 = arith.constant dense<0.000000e+00> : vector<16xf32>
    %64 = vector.multi_reduction <add>, %63, %cst_23 [1] : vector<16x32xf32> to vector<16xf32>
    %65 = vector.shape_cast %64 : vector<16xf32> to vector<16x1xf32>
    %cst_24 = arith.constant 3.125000e-02 : f32
    %66 = vector.broadcast %cst_24 : f32 to vector<16x1xf32>
    %67 = arith.mulf %65, %66 : vector<16x1xf32>
    %cst_25 = arith.constant 9.99999974E-6 : f32
    %68 = vector.broadcast %cst_25 : f32 to vector<16x1xf32>
    %69 = arith.addf %67, %68 : vector<16x1xf32>
    %70 = math.rsqrt %69 : vector<16x1xf32>
    %71 = vector.broadcast %70 : vector<16x1xf32> to vector<16x32xf32>
    %72 = arith.mulf %62, %71 : vector<16x32xf32>
    %73 = vector.broadcast %55 : vector<1x32xf32> to vector<16x32xf32>
    %74 = arith.mulf %72, %73 : vector<16x32xf32>
    %75 = vector.broadcast %56 : vector<1x32xf32> to vector<16x32xf32>
    %76 = arith.addf %74, %75 : vector<16x32xf32>
    %77 = arith.truncf %76 : vector<16x32xf32> to vector<16x32xbf16>
    %c0_26 = arith.constant 0 : index
    %c0_27 = arith.constant 0 : index
    %c0_28 = arith.constant 0 : index
    %78 = vector.load %arg7[%c0_26, %c0_27, %c0_28] : memref<1x32x2048xbf16, #tpu.memory_space<vmem>>, vector<1x32x2048xbf16>
    %79 = vector.shape_cast %78 : vector<1x32x2048xbf16> to vector<32x2048xbf16>
    %cst_29 = arith.constant dense<0.000000e+00> : vector<16x2048xf32>
    %80 = tpu.matmul %77, %79, %cst_29 {dimension_numbers = #tpu.dot_dimension_numbers<[1], [0], [0], [1], [0, 0, 1, 1], [], []>} : vector<16x32xbf16>, vector<32x2048xbf16>, vector<16x2048xf32> -> vector<16x2048xf32>
    %c0_30 = arith.constant 0 : index
    %c0_31 = arith.constant 0 : index
    %c0_32 = arith.constant 0 : index
    %81 = vector.load %arg8[%c0_30, %c0_31, %c0_32] : memref<1x1x2048xf32, #tpu.memory_space<vmem>>, vector<1x1x2048xf32>
    %82 = vector.shape_cast %81 : vector<1x1x2048xf32> to vector<1x2048xf32>
    %83 = vector.broadcast %82 : vector<1x2048xf32> to vector<16x2048xf32>
    %84 = arith.addf %80, %83 : vector<16x2048xf32>
    %cst_33 = arith.constant 0.000000e+00 : f32
    %85 = vector.broadcast %cst_33 : f32 to vector<16x2048xf32>
    %86 = arith.maximumf %84, %85 : vector<16x2048xf32>
    %87 = arith.truncf %86 : vector<16x2048xf32> to vector<16x2048xbf16>
    %c0_34 = arith.constant 0 : index
    %c0_35 = arith.constant 0 : index
    %c0_36 = arith.constant 0 : index
    %88 = vector.load %arg9[%c0_34, %c0_35, %c0_36] : memref<1x2048x32xbf16, #tpu.memory_space<vmem>>, vector<1x2048x32xbf16>
    %89 = vector.shape_cast %88 : vector<1x2048x32xbf16> to vector<2048x32xbf16>
    %cst_37 = arith.constant dense<0.000000e+00> : vector<16x32xf32>
    %90 = tpu.matmul %87, %89, %cst_37 {dimension_numbers = #tpu.dot_dimension_numbers<[1], [0], [0], [1], [0, 0, 1, 1], [], []>} : vector<16x2048xbf16>, vector<2048x32xbf16>, vector<16x32xf32> -> vector<16x32xf32>
    %91 = vector.extract_strided_slice %5 {offsets = [8, 0], sizes = [1, 32], strides = [1, 1]} : vector<16x32xf32> to vector<1x32xf32>
    %92 = vector.broadcast %91 : vector<1x32xf32> to vector<16x32xf32>
    %93 = arith.addf %90, %92 : vector<16x32xf32>
    %94 = arith.addf %76, %93 : vector<16x32xf32>
    %95 = vector.extract_strided_slice %5 {offsets = [6, 0], sizes = [1, 32], strides = [1, 1]} : vector<16x32xf32> to vector<1x32xf32>
    %96 = vector.extract_strided_slice %5 {offsets = [7, 0], sizes = [1, 32], strides = [1, 1]} : vector<16x32xf32> to vector<1x32xf32>
    %cst_38 = arith.constant dense<0.000000e+00> : vector<16xf32>
    %97 = vector.multi_reduction <add>, %94, %cst_38 [1] : vector<16x32xf32> to vector<16xf32>
    %98 = vector.shape_cast %97 : vector<16xf32> to vector<16x1xf32>
    %cst_39 = arith.constant 3.125000e-02 : f32
    %99 = vector.broadcast %cst_39 : f32 to vector<16x1xf32>
    %100 = arith.mulf %98, %99 : vector<16x1xf32>
    %101 = vector.broadcast %100 : vector<16x1xf32> to vector<16x32xf32>
    %102 = arith.subf %94, %101 : vector<16x32xf32>
    %103 = arith.mulf %102, %102 : vector<16x32xf32>
    %cst_40 = arith.constant dense<0.000000e+00> : vector<16xf32>
    %104 = vector.multi_reduction <add>, %103, %cst_40 [1] : vector<16x32xf32> to vector<16xf32>
    %105 = vector.shape_cast %104 : vector<16xf32> to vector<16x1xf32>
    %cst_41 = arith.constant 3.125000e-02 : f32
    %106 = vector.broadcast %cst_41 : f32 to vector<16x1xf32>
    %107 = arith.mulf %105, %106 : vector<16x1xf32>
    %cst_42 = arith.constant 9.99999974E-6 : f32
    %108 = vector.broadcast %cst_42 : f32 to vector<16x1xf32>
    %109 = arith.addf %107, %108 : vector<16x1xf32>
    %110 = math.rsqrt %109 : vector<16x1xf32>
    %111 = vector.broadcast %110 : vector<16x1xf32> to vector<16x32xf32>
    %112 = arith.mulf %102, %111 : vector<16x32xf32>
    %113 = vector.broadcast %95 : vector<1x32xf32> to vector<16x32xf32>
    %114 = arith.mulf %112, %113 : vector<16x32xf32>
    %115 = vector.broadcast %96 : vector<1x32xf32> to vector<16x32xf32>
    %116 = arith.addf %114, %115 : vector<16x32xf32>
    %c0_43 = arith.constant 0 : index
    %c0_44 = arith.constant 0 : index
    %117 = vector.load %arg10[%c0_43, %c0_44] : memref<16x32xf32, #tpu.memory_space<vmem>>, vector<16x32xf32>
    tpu.vector_store %arg10[%c0_43, %c0_44], %116 {strides = array<i32>} : memref<16x32xf32, #tpu.memory_space<vmem>>, vector<16x32xf32>,
    return
  }
  func.func @transform_0(%arg0: i32) -> (i32, i32) {
    %c0_i32 = arith.constant 0 : i32
    %c0_i32_0 = arith.constant 0 : i32
    %c0_i32_1 = arith.constant 0 : i32
    return %c0_i32, %c0_i32_0 : i32, i32
  }
  func.func @transform_1(%arg0: i32) -> (i32, i32) {
    %c0_i32 = arith.constant 0 : i32
    %c0_i32_0 = arith.constant 0 : i32
    %c0_i32_1 = arith.constant 0 : i32
    return %c0_i32, %c0_i32_0 : i32, i32
  }
  func.func @transform_2(%arg0: i32) -> (i32, i32) {
    %c0_i32 = arith.constant 0 : i32
    %c0_i32_0 = arith.constant 0 : i32
    %c0_i32_1 = arith.constant 0 : i32
    return %c0_i32, %c0_i32_0 : i32, i32
  }
  func.func @transform_3(%arg0: i32) -> (i32, i32, i32) {
    %c0_i32 = arith.constant 0 : i32
    %c0_i32_0 = arith.constant 0 : i32
    %c0_i32_1 = arith.constant 0 : i32
    return %arg0, %c0_i32, %c0_i32_0 : i32, i32, i32
  }
  func.func @transform_4(%arg0: i32) -> (i32, i32, i32) {
    %c0_i32 = arith.constant 0 : i32
    %c0_i32_0 = arith.constant 0 : i32
    %c0_i32_1 = arith.constant 0 : i32
    return %arg0, %c0_i32, %c0_i32_0 : i32, i32, i32
  }
  func.func @transform_5(%arg0: i32) -> (i32, i32, i32) {
    %c0_i32 = arith.constant 0 : i32
    %c0_i32_0 = arith.constant 0 : i32
    %c0_i32_1 = arith.constant 0 : i32
    return %arg0, %c0_i32, %c0_i32_0 : i32, i32, i32
  }
  func.func @transform_6(%arg0: i32) -> (i32, i32, i32) {
    %c0_i32 = arith.constant 0 : i32
    %c0_i32_0 = arith.constant 0 : i32
    %c0_i32_1 = arith.constant 0 : i32
    return %arg0, %c0_i32, %c0_i32_0 : i32, i32, i32
  }
  func.func @transform_7(%arg0: i32) -> (i32, i32, i32) {
    %c0_i32 = arith.constant 0 : i32
    %c0_i32_0 = arith.constant 0 : i32
    %c0_i32_1 = arith.constant 0 : i32
    return %arg0, %c0_i32, %c0_i32_0 : i32, i32, i32
  }
  func.func @transform_8(%arg0: i32) -> (i32, i32, i32) {
    %c0_i32 = arith.constant 0 : i32
    %c0_i32_0 = arith.constant 0 : i32
    %c0_i32_1 = arith.constant 0 : i32
    return %arg0, %c0_i32, %c0_i32_0 : i32, i32, i32
  }
  func.func @transform_9(%arg0: i32) -> (i32, i32) {
    %c0_i32 = arith.constant 0 : i32
    %c0_i32_0 = arith.constant 0 : i32
    %c0_i32_1 = arith.constant 0 : i32
    return %c0_i32, %c0_i32_0 : i32, i32
  }
}

</mosaic_0001>

<llo_original>
// kernel: simple_transformer_forward.1
$region0: #{simple_transformer_forward.1}
  #allocation0 [shape = 'u32[]', space=smem, size = 0x4, offset = 0x4, fixed_abs, tag = 'smem constant byte address 0x4 - core index']
  #allocation1 [shape = 'u32[144,128]{1,0:T(1,128)}', space=vmem, size = 0x12000, scoped, tag = 'internal scratch']
  %s0 = inlined_call_operand.vmem [shape: f32[16,32], index: 0, kind: input, shape index: {}]
  %s1 = inlined_call_operand.vmem [shape: f32[64,32], index: 1, kind: input, shape index: {}]
  %s2 = inlined_call_operand.vmem [shape: f32[64,16], index: 2, kind: input, shape index: {}]
  %s3 = inlined_call_operand.vmem [shape: f32[2,32,96], index: 3, kind: input, shape index: {}]
  %s4 = inlined_call_operand.vmem [shape: f32[2,32,32], index: 4, kind: input, shape index: {}]
  %s5 = inlined_call_operand.vmem [shape: f32[2,16,32], index: 5, kind: input, shape index: {}]
  %s6 = inlined_call_operand.vmem [shape: bf16[2,32,2048], index: 6, kind: input, shape index: {}]
  %s7 = inlined_call_operand.vmem [shape: f32[2,1,2048], index: 7, kind: input, shape index: {}]
  %s8 = inlined_call_operand.vmem [shape: bf16[2,2048,32], index: 8, kind: input, shape index: {}]
  %s9 = inlined_call_operand.hbm [shape: f32[16,32], index: 9, kind: output, shape index: {}]
  %s10 = sld [smem:[#allocation0]]
  $region73: #{simple_transformer_forward.1} parent=0
    _
  %s12 = ssub.s32 1, %s10
  %s13 = scalar_select 0, %s12, %s10
  $region1: #{simple_transformer_forward.1} parent=0
    #allocation2 [shape = 'u8[8192]{0}', space=vmem, size = 0x2000, scoped, tag = 'output window, operand 0, single buffered']
    #allocation3 [shape = 's32[2]{0}', space=sflag, size = 0x8, scoped, tag = 'scoped memory for simple_transformer_forward.1']
    %14 = vsyncpa [#allocation3], 0
    loop: start=0, step=1, limit=4
    $region2: #{simple_transformer_forward.1} parent=1 // loop_pre_header
      _
    $region3: #{simple_transformer_forward.1} parent=1 // loop_header
      %s16 = sphi 0, %s20
      %p17 = scmp.ge.s32.totalorder %s16, 4
      %s24 = sphi 0, %s24
      %s26 = sphi 0, %s24
      %s27 = sphi 0, %s26
      %s41 = sphi 0, %s27
      %s45 = sphi 0, %s45
      %s47 = sphi 0, %s45
      %s48 = sphi 0, %s47
      %s62 = sphi 0, %s48
      %s66 = sphi 0, %s66
      %s68 = sphi 0, %s66
      %s69 = sphi 0, %s68
      %s83 = sphi 0, %s69
      %s89 = sphi 0, %s91
      %s92 = sphi 0, %s89
      %s93 = sphi 0, %s92
      %s109 = sphi 0, %s93
      %s115 = sphi 0, %s117
      %s118 = sphi 0, %s115
      %s119 = sphi 0, %s118
      %s135 = sphi 0, %s119
      %s141 = sphi 0, %s143
      %s144 = sphi 0, %s141
      %s145 = sphi 0, %s144
      %s161 = sphi 0, %s145
      %s167 = sphi 0, %s169
      %s170 = sphi 0, %s167
      %s171 = sphi 0, %s170
      %s187 = sphi 0, %s171
      %s193 = sphi 0, %s195
      %s196 = sphi 0, %s193
      %s197 = sphi 0, %s196
      %s213 = sphi 0, %s197
      %s219 = sphi 0, %s221
      %s222 = sphi 0, %s219
      %s223 = sphi 0, %s222
      %s239 = sphi 0, %s223
      %s243 = sphi 0, %s243
      %s245 = sphi 0, %s243
      %s246 = sphi 0, %s245
      %s260 = sphi 0, %s246
    $region4: #{simple_transformer_forward.1} parent=1 // loop_header_branch
      %19 = sbr.rel (%p17) target = $region8
    $region5: #{simple_transformer_forward.1} parent=1 // loop_body
      %s21 = ssub.s32 %s16, 1
      %s22 = ssub.s32 %s16, 2
      %s23 = sadd.s32 %s16, 1
      %s25 = sadd.s32 %s24, 1
      %p28 = scmp.eq.s32.totalorder %s16, 1
      %p29 = scmp.ne.s32.totalorder %s24, %s26
      %p30 = scmp.eq.s32.totalorder %s16, 0
      %p31 = por %p29, %p30
      %p32 = scmp.ne.s32.totalorder %s24, %s26
      %p33 = scmp.eq.s32.totalorder %s21, 1
      %p34 = por %p32, %p33
      %p35 = scmp.ne.s32.totalorder %s26, %s27
      %p36 = scmp.eq.s32.totalorder %s21, 0
      %p37 = por %p35, %p36
      %p38 = scmp.ne.s32.totalorder %s26, %s27
      %p39 = scmp.eq.s32.totalorder %s22, 1
      %p40 = por %p38, %p39
      %p42 = scmp.ne.s32.totalorder %s27, %s41
      %p43 = scmp.eq.s32.totalorder %s22, 0
      %p44 = por %p42, %p43
      %s46 = sadd.s32 %s45, 1
      %p49 = scmp.eq.s32.totalorder %s16, 1
      %p50 = scmp.ne.s32.totalorder %s45, %s47
      %p51 = scmp.eq.s32.totalorder %s16, 0
      %p52 = por %p50, %p51
      %p53 = scmp.ne.s32.totalorder %s45, %s47
      %p54 = scmp.eq.s32.totalorder %s21, 1
      %p55 = por %p53, %p54
      %p56 = scmp.ne.s32.totalorder %s47, %s48
      %p57 = scmp.eq.s32.totalorder %s21, 0
      %p58 = por %p56, %p57
      %p59 = scmp.ne.s32.totalorder %s47, %s48
      %p60 = scmp.eq.s32.totalorder %s22, 1
      %p61 = por %p59, %p60
      %p63 = scmp.ne.s32.totalorder %s48, %s62
      %p64 = scmp.eq.s32.totalorder %s22, 0
      %p65 = por %p63, %p64
      %s67 = sadd.s32 %s66, 1
      %p70 = scmp.eq.s32.totalorder %s16, 1
      %p71 = scmp.ne.s32.totalorder %s66, %s68
      %p72 = scmp.eq.s32.totalorder %s16, 0
      %p73 = por %p71, %p72
      %p74 = scmp.ne.s32.totalorder %s66, %s68
      %p75 = scmp.eq.s32.totalorder %s21, 1
      %p76 = por %p74, %p75
      %p77 = scmp.ne.s32.totalorder %s68, %s69
      %p78 = scmp.eq.s32.totalorder %s21, 0
      %p79 = por %p77, %p78
      %p80 = scmp.ne.s32.totalorder %s68, %s69
      %p81 = scmp.eq.s32.totalorder %s22, 1
      %p82 = por %p80, %p81
      %p84 = scmp.ne.s32.totalorder %s69, %s83
      %p85 = scmp.eq.s32.totalorder %s22, 0
      %p86 = por %p84, %p85
      %s87 = ssub.s32 %s16, %s23
      %p88 = scmp.eq.s32.totalorder %s87, 0
      %s90 = sadd.s32 %s89, 1
      %s91 = scalar_select %p88, %s89, %s90
      %p94 = pneg %p88
      %p95 = scmp.eq.s32.totalorder %s16, 1
      %p96 = por %p94, %p95
      %p97 = scmp.ne.s32.totalorder %s89, %s92
      %p98 = scmp.eq.s32.totalorder %s16, 0
      %p99 = por %p97, %p98
      %p100 = scmp.ne.s32.totalorder %s89, %s92
      %p101 = scmp.eq.s32.totalorder %s21, 1
      %p102 = por %p100, %p101
      %p103 = scmp.ne.s32.totalorder %s92, %s93
      %p104 = scmp.eq.s32.totalorder %s21, 0
      %p105 = por %p103, %p104
      %p106 = scmp.ne.s32.totalorder %s92, %s93
      %p107 = scmp.eq.s32.totalorder %s22, 1
      %p108 = por %p106, %p107
      %p110 = scmp.ne.s32.totalorder %s93, %s109
      %p111 = scmp.eq.s32.totalorder %s22, 0
      %p112 = por %p110, %p111
      %s113 = ssub.s32 %s16, %s23
      %p114 = scmp.eq.s32.totalorder %s113, 0
      %s116 = sadd.s32 %s115, 1
      %s117 = scalar_select %p114, %s115, %s116
      %p120 = pneg %p114
      %p121 = scmp.eq.s32.totalorder %s16, 1
      %p122 = por %p120, %p121
      %p123 = scmp.ne.s32.totalorder %s115, %s118
      %p124 = scmp.eq.s32.totalorder %s16, 0
      %p125 = por %p123, %p124
      %p126 = scmp.ne.s32.totalorder %s115, %s118
      %p127 = scmp.eq.s32.totalorder %s21, 1
      %p128 = por %p126, %p127
      %p129 = scmp.ne.s32.totalorder %s118, %s119
      %p130 = scmp.eq.s32.totalorder %s21, 0
      %p131 = por %p129, %p130
      %p132 = scmp.ne.s32.totalorder %s118, %s119
      %p133 = scmp.eq.s32.totalorder %s22, 1
      %p134 = por %p132, %p133
      %p136 = scmp.ne.s32.totalorder %s119, %s135
      %p137 = scmp.eq.s32.totalorder %s22, 0
      %p138 = por %p136, %p137
      %s139 = ssub.s32 %s16, %s23
      %p140 = scmp.eq.s32.totalorder %s139, 0
      %s142 = sadd.s32 %s141, 1
      %s143 = scalar_select %p140, %s141, %s142
      %p146 = pneg %p140
      %p147 = scmp.eq.s32.totalorder %s16, 1
      %p148 = por %p146, %p147
      %p149 = scmp.ne.s32.totalorder %s141, %s144
      %p150 = scmp.eq.s32.totalorder %s16, 0
      %p151 = por %p149, %p150
      %p152 = scmp.ne.s32.totalorder %s141, %s144
      %p153 = scmp.eq.s32.totalorder %s21, 1
      %p154 = por %p152, %p153
      %p155 = scmp.ne.s32.totalorder %s144, %s145
      %p156 = scmp.eq.s32.totalorder %s21, 0
      %p157 = por %p155, %p156
      %p158 = scmp.ne.s32.totalorder %s144, %s145
      %p159 = scmp.eq.s32.totalorder %s22, 1
      %p160 = por %p158, %p159
      %p162 = scmp.ne.s32.totalorder %s145, %s161
      %p163 = scmp.eq.s32.totalorder %s22, 0
      %p164 = por %p162, %p163
      %s165 = ssub.s32 %s16, %s23
      %p166 = scmp.eq.s32.totalorder %s165, 0
      %s168 = sadd.s32 %s167, 1
      %s169 = scalar_select %p166, %s167, %s168
      %p172 = pneg %p166
      %p173 = scmp.eq.s32.totalorder %s16, 1
      %p174 = por %p172, %p173
      %p175 = scmp.ne.s32.totalorder %s167, %s170
      %p176 = scmp.eq.s32.totalorder %s16, 0
      %p177 = por %p175, %p176
      %p178 = scmp.ne.s32.totalorder %s167, %s170
      %p179 = scmp.eq.s32.totalorder %s21, 1
      %p180 = por %p178, %p179
      %p181 = scmp.ne.s32.totalorder %s170, %s171
      %p182 = scmp.eq.s32.totalorder %s21, 0
      %p183 = por %p181, %p182
      %p184 = scmp.ne.s32.totalorder %s170, %s171
      %p185 = scmp.eq.s32.totalorder %s22, 1
      %p186 = por %p184, %p185
      %p188 = scmp.ne.s32.totalorder %s171, %s187
      %p189 = scmp.eq.s32.totalorder %s22, 0
      %p190 = por %p188, %p189
      %s191 = ssub.s32 %s16, %s23
      %p192 = scmp.eq.s32.totalorder %s191, 0
      %s194 = sadd.s32 %s193, 1
      %s195 = scalar_select %p192, %s193, %s194
      %p198 = pneg %p192
      %p199 = scmp.eq.s32.totalorder %s16, 1
      %p200 = por %p198, %p199
      %p201 = scmp.ne.s32.totalorder %s193, %s196
      %p202 = scmp.eq.s32.totalorder %s16, 0
      %p203 = por %p201, %p202
      %p204 = scmp.ne.s32.totalorder %s193, %s196
      %p205 = scmp.eq.s32.totalorder %s21, 1
      %p206 = por %p204, %p205
      %p207 = scmp.ne.s32.totalorder %s196, %s197
      %p208 = scmp.eq.s32.totalorder %s21, 0
      %p209 = por %p207, %p208
      %p210 = scmp.ne.s32.totalorder %s196, %s197
      %p211 = scmp.eq.s32.totalorder %s22, 1
      %p212 = por %p210, %p211
      %p214 = scmp.ne.s32.totalorder %s197, %s213
      %p215 = scmp.eq.s32.totalorder %s22, 0
      %p216 = por %p214, %p215
      %s217 = ssub.s32 %s16, %s23
      %p218 = scmp.eq.s32.totalorder %s217, 0
      %s220 = sadd.s32 %s219, 1
      %s221 = scalar_select %p218, %s219, %s220
      %p224 = pneg %p218
      %p225 = scmp.eq.s32.totalorder %s16, 1
      %p226 = por %p224, %p225
      %p227 = scmp.ne.s32.totalorder %s219, %s222
      %p228 = scmp.eq.s32.totalorder %s16, 0
      %p229 = por %p227, %p228
      %p230 = scmp.ne.s32.totalorder %s219, %s222
      %p231 = scmp.eq.s32.totalorder %s21, 1
      %p232 = por %p230, %p231
      %p233 = scmp.ne.s32.totalorder %s222, %s223
      %p234 = scmp.eq.s32.totalorder %s21, 0
      %p235 = por %p233, %p234
      %p236 = scmp.ne.s32.totalorder %s222, %s223
      %p237 = scmp.eq.s32.totalorder %s22, 1
      %p238 = por %p236, %p237
      %p240 = scmp.ne.s32.totalorder %s223, %s239
      %p241 = scmp.eq.s32.totalorder %s22, 0
      %p242 = por %p240, %p241
      %s244 = sadd.s32 %s243, 1
      %p247 = scmp.eq.s32.totalorder %s16, 1
      %p248 = scmp.ne.s32.totalorder %s243, %s245
      %p249 = scmp.eq.s32.totalorder %s16, 0
      %p250 = por %p248, %p249
      %p251 = scmp.ne.s32.totalorder %s243, %s245
      %p252 = scmp.eq.s32.totalorder %s21, 1
      %p253 = por %p251, %p252
      %p254 = scmp.ne.s32.totalorder %s245, %s246
      %p255 = scmp.eq.s32.totalorder %s21, 0
      %p256 = por %p254, %p255
      %p257 = scmp.ne.s32.totalorder %s245, %s246
      %p258 = scmp.eq.s32.totalorder %s22, 1
      %p259 = por %p257, %p258
      %p261 = scmp.ne.s32.totalorder %s246, %s260
      %p262 = scmp.eq.s32.totalorder %s22, 0
      %p263 = por %p261, %p262
      %p264 = scmp.le.s32.totalorder 1, %s16
      %p265 = scmp.lt.s32.totalorder %s16, 3
      %p266 = pnand %p264, %p265
      %p267 = pneg %p266
      // Predicated region
      $region9: #{simple_transformer_forward.1} parent=5 // pred_check
        _
      $region10: #{simple_transformer_forward.1} parent=5 // pred_check_branch
        %269 = sbr.rel (%p266) target = $region12
      $region11: #{simple_transformer_forward.1} parent=5 // pred_region
        %s270 = ssub.s32 %s16, 1
        // Predicated region
        $region13: #{simple_transformer_forward.1} parent=11 // pred_check
          %p271 = pneg %p37
        $region14: #{simple_transformer_forward.1} parent=11 // pred_check_branch
          %273 = sbr.rel (%p271) target = $region16
        $region15: #{simple_transformer_forward.1} parent=11 // pred_region
          _
        $region16: #{simple_transformer_forward.1} parent=11 // pred_fallthru
          _
        // Predicated region
        $region17: #{simple_transformer_forward.1} parent=11 // pred_check
          %p274 = pneg %p58
        $region18: #{simple_transformer_forward.1} parent=11 // pred_check_branch
          %276 = sbr.rel (%p274) target = $region20
        $region19: #{simple_transformer_forward.1} parent=11 // pred_region
          _
        $region20: #{simple_transformer_forward.1} parent=11 // pred_fallthru
          _
        // Predicated region
        $region21: #{simple_transformer_forward.1} parent=11 // pred_check
          %p277 = pneg %p79
        $region22: #{simple_transformer_forward.1} parent=11 // pred_check_branch
          %279 = sbr.rel (%p277) target = $region24
        $region23: #{simple_transformer_forward.1} parent=11 // pred_region
          _
        $region24: #{simple_transformer_forward.1} parent=11 // pred_fallthru
          _
      $region12: #{simple_transformer_forward.1} parent=5 // pred_fallthru
        _
      %p280 = scmp.lt.s32.totalorder %s16, 2
      // Predicated region
      $region25: #{simple_transformer_forward.1} parent=5 // pred_check
        %p281 = pneg %p280
      $region26: #{simple_transformer_forward.1} parent=5 // pred_check_branch
        %283 = sbr.rel (%p281) target = $region28
      $region27: #{simple_transformer_forward.1} parent=5 // pred_region
        // Predicated region
        $region29: #{simple_transformer_forward.1} parent=27 // pred_check
          %p284 = pneg %p99
        $region30: #{simple_transformer_forward.1} parent=27 // pred_check_branch
          %286 = sbr.rel (%p284) target = $region32
        $region31: #{simple_transformer_forward.1} parent=27 // pred_region
          %p287 = scmp.lt.s32.totalorder %s16, 1
          %s288 = scalar_select %p287, %s16, 1
          %s289 = smul.addr %s288, 4
          %s290 = smul.addr %s289, 8
          %s291 = scalar_lea.vmem %s3, %s290
        $region32: #{simple_transformer_forward.1} parent=27 // pred_fallthru
          _
        // Predicated region
        $region33: #{simple_transformer_forward.1} parent=27 // pred_check
          %p292 = pneg %p125
        $region34: #{simple_transformer_forward.1} parent=27 // pred_check_branch
          %294 = sbr.rel (%p292) target = $region36
        $region35: #{simple_transformer_forward.1} parent=27 // pred_region
          %p295 = scmp.lt.s32.totalorder %s16, 1
          %s296 = scalar_select %p295, %s16, 1
          %s297 = smul.addr %s296, 4
          %s298 = smul.addr %s297, 8
          %s299 = scalar_lea.vmem %s4, %s298
        $region36: #{simple_transformer_forward.1} parent=27 // pred_fallthru
          _
        // Predicated region
        $region37: #{simple_transformer_forward.1} parent=27 // pred_check
          %p300 = pneg %p151
        $region38: #{simple_transformer_forward.1} parent=27 // pred_check_branch
          %302 = sbr.rel (%p300) target = $region40
        $region39: #{simple_transformer_forward.1} parent=27 // pred_region
          %p303 = scmp.lt.s32.totalorder %s16, 1
          %s304 = scalar_select %p303, %s16, 1
          %s305 = smul.addr %s304, 2
          %s306 = smul.addr %s305, 8
          %s307 = scalar_lea.vmem %s5, %s306
        $region40: #{simple_transformer_forward.1} parent=27 // pred_fallthru
          _
        // Predicated region
        $region41: #{simple_transformer_forward.1} parent=27 // pred_check
          %p308 = pneg %p177
        $region42: #{simple_transformer_forward.1} parent=27 // pred_check_branch
          %310 = sbr.rel (%p308) target = $region44
        $region43: #{simple_transformer_forward.1} parent=27 // pred_region
          %p311 = scmp.lt.s32.totalorder %s16, 1
          %s312 = scalar_select %p311, %s16, 1
          %s313 = smul.addr %s312, 64
          %s314 = smul.addr %s313, 4
          %s315 = scalar_lea.vmem %s6, %s314
        $region44: #{simple_transformer_forward.1} parent=27 // pred_fallthru
          _
        // Predicated region
        $region45: #{simple_transformer_forward.1} parent=27 // pred_check
          %p316 = pneg %p203
        $region46: #{simple_transformer_forward.1} parent=27 // pred_check_branch
          %318 = sbr.rel (%p316) target = $region48
        $region47: #{simple_transformer_forward.1} parent=27 // pred_region
          %p319 = scmp.lt.s32.totalorder %s16, 1
          %s320 = scalar_select %p319, %s16, 1
          %s321 = smul.addr %s320, 16
          %s322 = scalar_lea.vmem %s7, %s321
        $region48: #{simple_transformer_forward.1} parent=27 // pred_fallthru
          _
        // Predicated region
        $region49: #{simple_transformer_forward.1} parent=27 // pred_check
          %p323 = pneg %p229
        $region50: #{simple_transformer_forward.1} parent=27 // pred_check_branch
          %325 = sbr.rel (%p323) target = $region52
        $region51: #{simple_transformer_forward.1} parent=27 // pred_region
          %p326 = scmp.lt.s32.totalorder %s16, 1
          %s327 = scalar_select %p326, %s16, 1
          %s328 = smul.addr %s327, 256
          %s329 = smul.addr %s328, 4
          %s330 = scalar_lea.vmem %s8, %s329
        $region52: #{simple_transformer_forward.1} parent=27 // pred_fallthru
          _
      $region28: #{simple_transformer_forward.1} parent=5 // pred_fallthru
        _
      %p331 = scmp.le.s32.totalorder 1, %s16
      %p332 = scmp.lt.s32.totalorder %s16, 3
      %p333 = pnand %p331, %p332
      %p334 = pneg %p333
      // Predicated region
      $region53: #{simple_transformer_forward.1} parent=5 // pred_check
        _
      $region54: #{simple_transformer_forward.1} parent=5 // pred_check_branch
        %336 = sbr.rel (%p333) target = $region56
      $region55: #{simple_transformer_forward.1} parent=5 // pred_region
        %s337 = ssub.s32 %s16, 1
        %p338 = pneg %p37
        %p339 = pneg %p34
        %p340 = pneg %p58
        %p341 = pneg %p55
        %p342 = pneg %p79
        %p343 = pneg %p76
        %p344 = scmp.lt.s32.totalorder %s21, 1
        %s345 = scalar_select %p344, %s21, 1
        %s346 = smul.addr %s345, 4
        %s347 = smul.addr %s346, 8
        %s348 = scalar_lea.vmem %s3, %s347
        %p349 = pneg %p105
        %p350 = pneg %p102
        %p351 = scmp.lt.s32.totalorder %s21, 1
        %s352 = scalar_select %p351, %s21, 1
        %s353 = smul.addr %s352, 4
        %s354 = smul.addr %s353, 8
        %s355 = scalar_lea.vmem %s4, %s354
        %p356 = pneg %p131
        %p357 = pneg %p128
        %p358 = scmp.lt.s32.totalorder %s21, 1
        %s359 = scalar_select %p358, %s21, 1
        %s360 = smul.addr %s359, 2
        %s361 = smul.addr %s360, 8
        %s362 = scalar_lea.vmem %s5, %s361
        %p363 = pneg %p157
        %p364 = pneg %p154
        %p365 = scmp.lt.s32.totalorder %s21, 1
        %s366 = scalar_select %p365, %s21, 1
        %s367 = smul.addr %s366, 64
        %s368 = smul.addr %s367, 4
        %s369 = scalar_lea.vmem %s6, %s368
        %p370 = pneg %p183
        %p371 = pneg %p180
        %p372 = scmp.lt.s32.totalorder %s21, 1
        %s373 = scalar_select %p372, %s21, 1
        %s374 = smul.addr %s373, 16
        %s375 = scalar_lea.vmem %s7, %s374
        %p376 = pneg %p209
        %p377 = pneg %p206
        %p378 = scmp.lt.s32.totalorder %s21, 1
        %s379 = scalar_select %p378, %s21, 1
        %s380 = smul.addr %s379, 256
        %s381 = smul.addr %s380, 4
        %s382 = scalar_lea.vmem %s8, %s381
        %p383 = pneg %p235
        %p384 = pneg %p232
        %p385 = pneg %p256
        %p386 = pneg %p253
        %p387 = scmp.lt.s32.totalorder %s21, 1
        %s388 = scalar_select %p387, %s21, 1
        %s389 = smul.addr %s388, 4
        %s390 = smul.addr %s389, 8
        %s391 = scalar_lea.vmem %s3, %s390
        %p392 = scmp.lt.s32.totalorder %s21, 1
        %s393 = scalar_select %p392, %s21, 1
        %s394 = smul.addr %s393, 4
        %s395 = smul.addr %s394, 8
        %s396 = scalar_lea.vmem %s4, %s395
        %p397 = scmp.lt.s32.totalorder %s21, 1
        %s398 = scalar_select %p397, %s21, 1
        %s399 = smul.addr %s398, 2
        %s400 = smul.addr %s399, 8
        %s401 = scalar_lea.vmem %s5, %s400
        %p402 = scmp.lt.s32.totalorder %s21, 1
        %s403 = scalar_select %p402, %s21, 1
        %s404 = smul.addr %s403, 64
        %s405 = smul.addr %s404, 4
        %s406 = scalar_lea.vmem %s6, %s405
        %p407 = scmp.lt.s32.totalorder %s21, 1
        %s408 = scalar_select %p407, %s21, 1
        %s409 = smul.addr %s408, 16
        %s410 = scalar_lea.vmem %s7, %s409
        %p411 = scmp.lt.s32.totalorder %s21, 1
        %s412 = scalar_select %p411, %s21, 1
        %s413 = smul.addr %s412, 256
        %s414 = smul.addr %s413, 4
        %s415 = scalar_lea.vmem %s8, %s414
        %p417 = scmp.eq.s32.totalorder %s21, 0
        // Predicated region
        $region57: #{simple_transformer_forward.1} parent=55 // pred_check
          %p418 = pneg %p417
        $region58: #{simple_transformer_forward.1} parent=55 // pred_check_branch
          %420 = sbr.rel (%p418) target = $region60
        $region59: #{simple_transformer_forward.1} parent=55 // pred_region
          %v421 = vld [vmem:[%s0] sm:$0xff]
          %v422 = vld [vmem:[%s0 + $0x8] sm:$0xff]
          %vm423 = vcmask 261120
          %424 = vst.msk [vmem:[#allocation2] sm:$0xff] %vm423, %v421
          %425 = vst.msk [vmem:[#allocation2 + $0x8] sm:$0xff] %vm423, %v422
        $region60: #{simple_transformer_forward.1} parent=55 // pred_fallthru
          _
        %v426 = vld [vmem:[#allocation2] sm:$0xff]
        %v427 = vld [vmem:[#allocation2 + $0x8] sm:$0xff]
        %v428 = vld [vmem:[%s401] sm:$0xff]
        %v429 = vld [vmem:[%s401 + $0x8] sm:$0xff]
        %v430 = vld [vmem:[%s391] sm:$0xff]
        %v431 = vld [vmem:[%s391 + $0x8] sm:$0xff]
        %v432 = vld [vmem:[%s391 + $0x10] sm:$0xff]
        %v433 = vld [vmem:[%s391 + $0x18] sm:$0xff]
        %vm434 = vcmask 261120
        %v436 = vsel %vm434, %v426, 0
        %v439 = vsel %vm434, %v427, 0
        %441 = vmatprep.subr.mxu0 0.0
        %442 = vmatpush1.msra.mxu0 %v430
        %443 = vmatprep.subr.mxu0 0.0
        %444 = vmatpush1.msra.mxu0 %v431
        %445 = vmatprep.subr.mxu0 0.0
        %446 = vmatpush1.msra.mxu0 %v432
        %447 = vmatprep.subr.mxu0 0.0
        %448 = vmatpush1.msra.mxu0 %v433
        %449 = vmatprep.subr.mxu0 0.0
        %450 = vmatpush1.msra.mxu0 0.0
        %451 = vmatprep.subr.mxu0 0.0
        %452 = vmatpush1.msra.mxu0 0.0
        %453 = vmatprep.subr.mxu0 0.0
        %454 = vmatpush1.msra.mxu0 0.0
        %455 = vmatprep.subr.mxu0 0.0
        %456 = vmatpush1.msra.mxu0 0.0
        %457 = vmatprep.subr.mxu0 0.0
        %458 = vmatpush1.msra.mxu0 0.0
        %459 = vmatprep.subr.mxu0 0.0
        %460 = vmatpush1.msra.mxu0 0.0
        %461 = vmatprep.subr.mxu0 0.0
        %462 = vmatpush1.msra.mxu0 0.0
        %463 = vmatprep.subr.mxu0 0.0
        %464 = vmatpush1.msra.mxu0 0.0
        %465 = vmatprep.subr.mxu0 0.0
        %466 = vmatpush1.msra.mxu0 0.0
        %467 = vmatprep.subr.mxu0 0.0
        %468 = vmatpush1.msra.mxu0 0.0
        %469 = vmatprep.subr.mxu0 0.0
        %470 = vmatpush1.msra.mxu0 0.0
        %471 = vmatprep.subr.mxu0 0.0
        %472 = vmatpush1.msra.mxu0 0.0
        %473 = vmatprep.subr.mxu0 0.0
        %474 = vmatpush1.msra.mxu0 0.0
        %475 = vmatprep.subr.mxu0 0.0
        %476 = vmatpush1.msra.mxu0 0.0
        %477 = vmatprep.subr.mxu0 0.0
        %478 = vmatpush1.msra.mxu0 0.0
        %479 = vmatprep.subr.mxu0 0.0
        %480 = vmatpush1.msra.mxu0 0.0
        %481 = vmatprep.subr.mxu0 0.0
        %482 = vmatpush1.msra.mxu0 0.0
        %483 = vmatprep.subr.mxu0 0.0
        %484 = vmatpush1.msra.mxu0 0.0
        %485 = vmatprep.subr.mxu0 0.0
        %486 = vmatpush1.msra.mxu0 0.0
        %487 = vmatprep.subr.mxu0 0.0
        %488 = vmatpush1.msra.mxu0 0.0
        %489 = vmatprep.subr.mxu0 0.0
        %490 = vmatpush1.msra.mxu0 0.0
        %491 = vmatprep.subr.mxu0 0.0
        %492 = vmatpush1.msra.mxu0 0.0
        %493 = vmatprep.subr.mxu0 0.0
        %494 = vmatpush1.msra.mxu0 0.0
        %495 = vmatprep.subr.mxu0 0.0
        %496 = vmatpush1.msra.mxu0 0.0
        %497 = vmatprep.subr.mxu0 0.0
        %498 = vmatpush1.msra.mxu0 0.0
        %499 = vmatprep.subr.mxu0 0.0
        %500 = vmatpush1.msra.mxu0 0.0
        %501 = vmatprep.subr.mxu0 0.0
        %502 = vmatpush1.msra.mxu0 0.0
        %503 = vmatprep.subr.mxu0 0.0
        %504 = vmatpush1.msra.mxu0 0.0
        %505 = vmatprep.mubr.f32.mxu0 0.0
        %506 = vmatmul.mubr.f32.gmra.mrb[0].mxu0 %v436
        %v507 = vpop.f32.mrb[0].mxu0
        %v508 = vadd.f32 0.0, %v507
        %v509 = vpop.f32.mrb[0].mxu0
        %510 = vmatprep.mubr.f32.mxu0 0.0
        %511 = vmatmul.mubr.f32.gmra.mrb[0].mxu0 %v439
        %v512 = vpop.f32.mrb[0].mxu0
        %v513 = vadd.f32 0.0, %v512
        %v514 = vpop.f32.mrb[0].mxu0
        %515 = vdwg.mxu0
        %v516 = vlaneseq
        %v517 = vshrl.u32 %v516, 7
        %v518 = vsub.s32 0, %v517
        %v519 = vrot.slane %v428, %v518
        %v520 = vadd.f32 %v508, %v519
        %v521 = vadd.f32 %v513, %v519
        %v522 = vlaneseq
        %v523 = vshrl.u32 %v522, 7
        %v524 = vsub.s32 1, %v523
        %v525 = vrot.slane %v428, %v524
        %527 = vrot.lane.b32.xlu0 %v525, 32
        %v528 = vpop.permute.xlu0 %527
        %v530 = vadd.f32 %v508, %v528
        %v531 = vadd.f32 %v513, %v528
        %v532 = vlaneseq
        %v533 = vshrl.u32 %v532, 7
        %v534 = vsub.s32 2, %v533
        %v535 = vrot.slane %v428, %v534
        %537 = vrot.lane.b32.xlu0 %v535, 64
        %v538 = vpop.permute.xlu0 %537
        %v540 = vadd.f32 %v508, %v538
        %v541 = vadd.f32 %v513, %v538
        %v542 = vld [vmem:[%s1] sm:$0xff]
        %v543 = vld [vmem:[%s1 + $0x8] sm:$0xff]
        %v544 = vld [vmem:[%s1 + $0x10] sm:$0xff]
        %v545 = vld [vmem:[%s1 + $0x18] sm:$0xff]
        %v546 = vld [vmem:[%s1 + $0x20] sm:$0xff]
        %v547 = vld [vmem:[%s1 + $0x28] sm:$0xff]
        %v548 = vld [vmem:[%s1 + $0x30] sm:$0xff]
        %v549 = vld [vmem:[%s1 + $0x38] sm:$0xff]
        %v550 = vmul.f32 %v520, %v542
        %v551 = vmul.f32 %v521, %v543
        %v552 = vmul.f32 %v520, %v544
        %v553 = vmul.f32 %v521, %v545
        %v554 = vmul.f32 %v520, %v546
        %v555 = vmul.f32 %v521, %v547
        %v556 = vmul.f32 %v520, %v548
        %v557 = vmul.f32 %v521, %v549
        %560 = vrot.lane.b32.xlu0 %v530, 96
        %v561 = vpop.permute.xlu0 %560
        %562 = vrot.lane.b32.xlu0 %v531, 96
        %v563 = vpop.permute.xlu0 %562
        %v565 = vsel %vm434, %v550, 0
        %v568 = vsel %vm434, %v551, 0
        %v571 = vsel %vm434, %v552, 0
        %v574 = vsel %vm434, %v553, 0
        %v577 = vsel %vm434, %v554, 0
        %v580 = vsel %vm434, %v555, 0
        %v583 = vsel %vm434, %v556, 0
        %v586 = vsel %vm434, %v557, 0
        %v588 = vsel %vm434, %v561, 0
        %v590 = vsel %vm434, %v563, 0
        %592 = vmatprep.subr.mxu0 0.0
        %593 = vmatpush1.xpose.msra.mxu0 %v588
        %594 = vmatprep.subr.mxu0 0.0
        %595 = vmatpush1.xpose.msra.mxu0 %v590
        %596 = vmatprep.subr.mxu0 0.0
        %597 = vmatpush1.xpose.msra.mxu0 0.0
        %598 = vmatprep.subr.mxu0 0.0
        %599 = vmatpush1.xpose.msra.mxu0 0.0
        %600 = vmatprep.subr.mxu0 0.0
        %601 = vmatpush1.xpose.msra.mxu0 0.0
        %602 = vmatprep.subr.mxu0 0.0
        %603 = vmatpush1.xpose.msra.mxu0 0.0
        %604 = vmatprep.subr.mxu0 0.0
        %605 = vmatpush1.xpose.msra.mxu0 0.0
        %606 = vmatprep.subr.mxu0 0.0
        %607 = vmatpush1.xpose.msra.mxu0 0.0
        %608 = vmatprep.subr.mxu0 0.0
        %609 = vmatpush1.xpose.msra.mxu0 0.0
        %610 = vmatprep.subr.mxu0 0.0
        %611 = vmatpush1.xpose.msra.mxu0 0.0
        %612 = vmatprep.subr.mxu0 0.0
        %613 = vmatpush1.xpose.msra.mxu0 0.0
        %614 = vmatprep.subr.mxu0 0.0
        %615 = vmatpush1.xpose.msra.mxu0 0.0
        %616 = vmatprep.subr.mxu0 0.0
        %617 = vmatpush1.xpose.msra.mxu0 0.0
        %618 = vmatprep.subr.mxu0 0.0
        %619 = vmatpush1.xpose.msra.mxu0 0.0
        %620 = vmatprep.subr.mxu0 0.0
        %621 = vmatpush1.xpose.msra.mxu0 0.0
        %622 = vmatprep.subr.mxu0 0.0
        %623 = vmatpush1.xpose.msra.mxu0 0.0
        %624 = vmatprep.subr.mxu0 0.0
        %625 = vmatpush1.xpose.msra.mxu0 0.0
        %626 = vmatprep.subr.mxu0 0.0
        %627 = vmatpush1.xpose.msra.mxu0 0.0
        %628 = vmatprep.subr.mxu0 0.0
        %629 = vmatpush1.xpose.msra.mxu0 0.0
        %630 = vmatprep.subr.mxu0 0.0
        %631 = vmatpush1.xpose.msra.mxu0 0.0
        %632 = vmatprep.subr.mxu0 0.0
        %633 = vmatpush1.xpose.msra.mxu0 0.0
        %634 = vmatprep.subr.mxu0 0.0
        %635 = vmatpush1.xpose.msra.mxu0 0.0
        %636 = vmatprep.subr.mxu0 0.0
        %637 = vmatpush1.xpose.msra.mxu0 0.0
        %638 = vmatprep.subr.mxu0 0.0
        %639 = vmatpush1.xpose.msra.mxu0 0.0
        %640 = vmatprep.subr.mxu0 0.0
        %641 = vmatpush1.xpose.msra.mxu0 0.0
        %642 = vmatprep.subr.mxu0 0.0
        %643 = vmatpush1.xpose.msra.mxu0 0.0
        %644 = vmatprep.subr.mxu0 0.0
        %645 = vmatpush1.xpose.msra.mxu0 0.0
        %646 = vmatprep.subr.mxu0 0.0
        %647 = vmatpush1.xpose.msra.mxu0 0.0
        %648 = vmatprep.subr.mxu0 0.0
        %649 = vmatpush1.xpose.msra.mxu0 0.0
        %650 = vmatprep.subr.mxu0 0.0
        %651 = vmatpush1.xpose.msra.mxu0 0.0
        %652 = vmatprep.subr.mxu0 0.0
        %653 = vmatpush1.xpose.msra.mxu0 0.0
        %654 = vmatprep.subr.mxu0 0.0
        %655 = vmatpush1.xpose.msra.mxu0 0.0
        %656 = vmatprep.mubr.f32.mxu0 0.0
        %657 = vmatmul.mubr.f32.gmra.mrb[0].mxu0 %v565
        %v658 = vpop.f32.mrb[0].mxu0
        %v659 = vadd.f32 0.0, %v658
        %v660 = vpop.f32.mrb[0].mxu0
        %661 = vmatprep.mubr.f32.mxu0 0.0
        %662 = vmatmul.mubr.f32.gmra.mrb[0].mxu0 %v568
        %v663 = vpop.f32.mrb[0].mxu0
        %v664 = vadd.f32 0.0, %v663
        %v665 = vpop.f32.mrb[0].mxu0
        %666 = vmatprep.mubr.f32.mxu0 0.0
        %667 = vmatmul.mubr.f32.gmra.mrb[0].mxu0 %v571
        %v668 = vpop.f32.mrb[0].mxu0
        %v669 = vadd.f32 0.0, %v668
        %v670 = vpop.f32.mrb[0].mxu0
        %671 = vmatprep.mubr.f32.mxu0 0.0
        %672 = vmatmul.mubr.f32.gmra.mrb[0].mxu0 %v574
        %v673 = vpop.f32.mrb[0].mxu0
        %v674 = vadd.f32 0.0, %v673
        %v675 = vpop.f32.mrb[0].mxu0
        %676 = vmatprep.mubr.f32.mxu0 0.0
        %677 = vmatmul.mubr.f32.gmra.mrb[0].mxu0 %v577
        %v678 = vpop.f32.mrb[0].mxu0
        %v679 = vadd.f32 0.0, %v678
        %v680 = vpop.f32.mrb[0].mxu0
        %681 = vmatprep.mubr.f32.mxu0 0.0
        %682 = vmatmul.mubr.f32.gmra.mrb[0].mxu0 %v580
        %v683 = vpop.f32.mrb[0].mxu0
        %v684 = vadd.f32 0.0, %v683
        %v685 = vpop.f32.mrb[0].mxu0
        %686 = vmatprep.mubr.f32.mxu0 0.0
        %687 = vmatmul.mubr.f32.gmra.mrb[0].mxu0 %v583
        %v688 = vpop.f32.mrb[0].mxu0
        %v689 = vadd.f32 0.0, %v688
        %v690 = vpop.f32.mrb[0].mxu0
        %691 = vmatprep.mubr.f32.mxu0 0.0
        %692 = vmatmul.mubr.f32.gmra.mrb[0].mxu0 %v586
        %v693 = vpop.f32.mrb[0].mxu0
        %v694 = vadd.f32 0.0, %v693
        %v695 = vpop.f32.mrb[0].mxu0
        %696 = vdwg.mxu0
        %v697 = vmul.f32 %v659, 0.35355338
        %v698 = vmul.f32 %v664, 0.35355338
        %v699 = vmul.f32 %v669, 0.35355338
        %v700 = vmul.f32 %v674, 0.35355338
        %v701 = vmul.f32 %v679, 0.35355338
        %v702 = vmul.f32 %v684, 0.35355338
        %v703 = vmul.f32 %v689, 0.35355338
        %v704 = vmul.f32 %v694, 0.35355338
        %v705 = vld [vmem:[%s2] sm:$0xff]
        %v706 = vld [vmem:[%s2 + $0x8] sm:$0xff]
        %v707 = vld [vmem:[%s2 + $0x10] sm:$0xff]
        %v708 = vld [vmem:[%s2 + $0x18] sm:$0xff]
        %v709 = vld [vmem:[%s2 + $0x20] sm:$0xff]
        %v710 = vld [vmem:[%s2 + $0x28] sm:$0xff]
        %v711 = vld [vmem:[%s2 + $0x30] sm:$0xff]
        %v712 = vld [vmem:[%s2 + $0x38] sm:$0xff]
        %v713 = vadd.f32 %v697, %v705
        %v714 = vadd.f32 %v698, %v706
        %v715 = vadd.f32 %v699, %v707
        %v716 = vadd.f32 %v700, %v708
        %v717 = vadd.f32 %v701, %v709
        %v718 = vadd.f32 %v702, %v710
        %v719 = vadd.f32 %v703, %v711
        %v720 = vadd.f32 %v704, %v712
        %vm721 = vcmask 130048
        %v722 = vsel %vm721, %v713, -inf
        %723 = vmax.xlane.f32.xlu0 %v722
        %v724 = vpop.xlane.xlu0 %723
        %v725 = vsel %vm721, %v714, -inf
        %726 = vmax.xlane.f32.xlu0 %v725
        %v727 = vpop.xlane.xlu0 %726
        %v728 = vsel %vm721, %v715, -inf
        %729 = vmax.xlane.f32.xlu0 %v728
        %v730 = vpop.xlane.xlu0 %729
        %v731 = vsel %vm721, %v716, -inf
        %732 = vmax.xlane.f32.xlu0 %v731
        %v733 = vpop.xlane.xlu0 %732
        %v734 = vsel %vm721, %v717, -inf
        %735 = vmax.xlane.f32.xlu0 %v734
        %v736 = vpop.xlane.xlu0 %735
        %v737 = vsel %vm721, %v718, -inf
        %738 = vmax.xlane.f32.xlu0 %v737
        %v739 = vpop.xlane.xlu0 %738
        %v740 = vsel %vm721, %v719, -inf
        %741 = vmax.xlane.f32.xlu0 %v740
        %v742 = vpop.xlane.xlu0 %741
        %v743 = vsel %vm721, %v720, -inf
        %744 = vmax.xlane.f32.xlu0 %v743
        %v745 = vpop.xlane.xlu0 %744
        %v746 = vsub.f32 %v713, %v724
        %v747 = vsub.f32 %v714, %v727
        %v748 = vsub.f32 %v715, %v730
        %v749 = vsub.f32 %v716, %v733
        %v750 = vsub.f32 %v717, %v736
        %v751 = vsub.f32 %v718, %v739
        %v752 = vsub.f32 %v719, %v742
        %v753 = vsub.f32 %v720, %v745
        %v754 = vmul.f32 %v746, 1.442695
        %v755 = vpow.pop %v754
        %v756 = vmul.f32 %v747, 1.442695
        %v757 = vpow.pop %v756
        %v758 = vmul.f32 %v748, 1.442695
        %v759 = vpow.pop %v758
        %v760 = vmul.f32 %v749, 1.442695
        %v761 = vpow.pop %v760
        %v762 = vmul.f32 %v750, 1.442695
        %v763 = vpow.pop %v762
        %v764 = vmul.f32 %v751, 1.442695
        %v765 = vpow.pop %v764
        %v766 = vmul.f32 %v752, 1.442695
        %v767 = vpow.pop %v766
        %v768 = vmul.f32 %v753, 1.442695
        %v769 = vpow.pop %v768
        %v770 = vsel %vm721, %v755, 0.0
        %771 = vadd.xlane.f32.xlu0 %v770
        %v772 = vpop.xlane.xlu0 %771
        %v773 = vsel %vm721, %v757, 0.0
        %774 = vadd.xlane.f32.xlu0 %v773
        %v775 = vpop.xlane.xlu0 %774
        %v776 = vsel %vm721, %v759, 0.0
        %777 = vadd.xlane.f32.xlu0 %v776
        %v778 = vpop.xlane.xlu0 %777
        %v779 = vsel %vm721, %v761, 0.0
        %780 = vadd.xlane.f32.xlu0 %v779
        %v781 = vpop.xlane.xlu0 %780
        %v782 = vsel %vm721, %v763, 0.0
        %783 = vadd.xlane.f32.xlu0 %v782
        %v784 = vpop.xlane.xlu0 %783
        %v785 = vsel %vm721, %v765, 0.0
        %786 = vadd.xlane.f32.xlu0 %v785
        %v787 = vpop.xlane.xlu0 %786
        %v788 = vsel %vm721, %v767, 0.0
        %789 = vadd.xlane.f32.xlu0 %v788
        %v790 = vpop.xlane.xlu0 %789
        %v791 = vsel %vm721, %v769, 0.0
        %792 = vadd.xlane.f32.xlu0 %v791
        %v793 = vpop.xlane.xlu0 %792
        %v794 = vrcp.pop %v772
        %v795 = vrcp.pop %v775
        %v796 = vrcp.pop %v778
        %v797 = vrcp.pop %v781
        %v798 = vrcp.pop %v784
        %v799 = vrcp.pop %v787
        %v800 = vrcp.pop %v790
        %v801 = vrcp.pop %v793
        %v802 = vmul.f32 %v755, %v794
        %v803 = vmul.f32 %v757, %v795
        %v804 = vmul.f32 %v759, %v796
        %v805 = vmul.f32 %v761, %v797
        %v806 = vmul.f32 %v763, %v798
        %v807 = vmul.f32 %v765, %v799
        %v808 = vmul.f32 %v767, %v800
        %v809 = vmul.f32 %v769, %v801
        %812 = vrot.lane.b32.xlu0 %v540, 64
        %v813 = vpop.permute.xlu0 %812
        %814 = vrot.lane.b32.xlu0 %v541, 64
        %v815 = vpop.permute.xlu0 %814
        %v819 = vsel %vm721, %v802, 0
        %v822 = vsel %vm721, %v803, 0
        %v825 = vsel %vm721, %v804, 0
        %v828 = vsel %vm721, %v805, 0
        %v831 = vsel %vm721, %v806, 0
        %v834 = vsel %vm721, %v807, 0
        %v837 = vsel %vm721, %v808, 0
        %v840 = vsel %vm721, %v809, 0
        %842 = vmatprep.subr.mxu0 0.0
        %843 = vmatpush1.msra.mxu0 %v813
        %844 = vmatprep.subr.mxu0 0.0
        %845 = vmatpush1.msra.mxu0 %v815
        %846 = vmatprep.subr.mxu0 0.0
        %847 = vmatpush1.msra.mxu0 0.0
        %848 = vmatprep.subr.mxu0 0.0
        %849 = vmatpush1.msra.mxu0 0.0
        %850 = vmatprep.subr.mxu0 0.0
        %851 = vmatpush1.msra.mxu0 0.0
        %852 = vmatprep.subr.mxu0 0.0
        %853 = vmatpush1.msra.mxu0 0.0
        %854 = vmatprep.subr.mxu0 0.0
        %855 = vmatpush1.msra.mxu0 0.0
        %856 = vmatprep.subr.mxu0 0.0
        %857 = vmatpush1.msra.mxu0 0.0
        %858 = vmatprep.subr.mxu0 0.0
        %859 = vmatpush1.msra.mxu0 0.0
        %860 = vmatprep.subr.mxu0 0.0
        %861 = vmatpush1.msra.mxu0 0.0
        %862 = vmatprep.subr.mxu0 0.0
        %863 = vmatpush1.msra.mxu0 0.0
        %864 = vmatprep.subr.mxu0 0.0
        %865 = vmatpush1.msra.mxu0 0.0
        %866 = vmatprep.subr.mxu0 0.0
        %867 = vmatpush1.msra.mxu0 0.0
        %868 = vmatprep.subr.mxu0 0.0
        %869 = vmatpush1.msra.mxu0 0.0
        %870 = vmatprep.subr.mxu0 0.0
        %871 = vmatpush1.msra.mxu0 0.0
        %872 = vmatprep.subr.mxu0 0.0
        %873 = vmatpush1.msra.mxu0 0.0
        %874 = vmatprep.subr.mxu0 0.0
        %875 = vmatpush1.msra.mxu0 0.0
        %876 = vmatprep.subr.mxu0 0.0
        %877 = vmatpush1.msra.mxu0 0.0
        %878 = vmatprep.subr.mxu0 0.0
        %879 = vmatpush1.msra.mxu0 0.0
        %880 = vmatprep.subr.mxu0 0.0
        %881 = vmatpush1.msra.mxu0 0.0
        %882 = vmatprep.subr.mxu0 0.0
        %883 = vmatpush1.msra.mxu0 0.0
        %884 = vmatprep.subr.mxu0 0.0
        %885 = vmatpush1.msra.mxu0 0.0
        %886 = vmatprep.subr.mxu0 0.0
        %887 = vmatpush1.msra.mxu0 0.0
        %888 = vmatprep.subr.mxu0 0.0
        %889 = vmatpush1.msra.mxu0 0.0
        %890 = vmatprep.subr.mxu0 0.0
        %891 = vmatpush1.msra.mxu0 0.0
        %892 = vmatprep.subr.mxu0 0.0
        %893 = vmatpush1.msra.mxu0 0.0
        %894 = vmatprep.subr.mxu0 0.0
        %895 = vmatpush1.msra.mxu0 0.0
        %896 = vmatprep.subr.mxu0 0.0
        %897 = vmatpush1.msra.mxu0 0.0
        %898 = vmatprep.subr.mxu0 0.0
        %899 = vmatpush1.msra.mxu0 0.0
        %900 = vmatprep.subr.mxu0 0.0
        %901 = vmatpush1.msra.mxu0 0.0
        %902 = vmatprep.subr.mxu0 0.0
        %903 = vmatpush1.msra.mxu0 0.0
        %904 = vmatprep.subr.mxu0 0.0
        %905 = vmatpush1.msra.mxu0 0.0
        %906 = vmatprep.mubr.f32.mxu0 0.0
        %907 = vmatmul.mubr.f32.gmra.mrb[0].mxu0 %v819
        %v908 = vpop.f32.mrb[0].mxu0
        %v909 = vadd.f32 0.0, %v908
        %v910 = vpop.f32.mrb[0].mxu0
        %911 = vmatprep.mubr.f32.mxu0 0.0
        %912 = vmatmul.mubr.f32.gmra.mrb[0].mxu0 %v822
        %v913 = vpop.f32.mrb[0].mxu0
        %v914 = vadd.f32 0.0, %v913
        %v915 = vpop.f32.mrb[0].mxu0
        %916 = vmatprep.mubr.f32.mxu0 0.0
        %917 = vmatmul.mubr.f32.gmra.mrb[0].mxu0 %v825
        %v918 = vpop.f32.mrb[0].mxu0
        %v919 = vadd.f32 0.0, %v918
        %v920 = vpop.f32.mrb[0].mxu0
        %921 = vmatprep.mubr.f32.mxu0 0.0
        %922 = vmatmul.mubr.f32.gmra.mrb[0].mxu0 %v828
        %v923 = vpop.f32.mrb[0].mxu0
        %v924 = vadd.f32 0.0, %v923
        %v925 = vpop.f32.mrb[0].mxu0
        %926 = vmatprep.mubr.f32.mxu0 0.0
        %927 = vmatmul.mubr.f32.gmra.mrb[0].mxu0 %v831
        %v928 = vpop.f32.mrb[0].mxu0
        %v929 = vadd.f32 0.0, %v928
        %v930 = vpop.f32.mrb[0].mxu0
        %931 = vmatprep.mubr.f32.mxu0 0.0
        %932 = vmatmul.mubr.f32.gmra.mrb[0].mxu0 %v834
        %v933 = vpop.f32.mrb[0].mxu0
        %v934 = vadd.f32 0.0, %v933
        %v935 = vpop.f32.mrb[0].mxu0
        %936 = vmatprep.mubr.f32.mxu0 0.0
        %937 = vmatmul.mubr.f32.gmra.mrb[0].mxu0 %v837
        %v938 = vpop.f32.mrb[0].mxu0
        %v939 = vadd.f32 0.0, %v938
        %v940 = vpop.f32.mrb[0].mxu0
        %941 = vmatprep.mubr.f32.mxu0 0.0
        %942 = vmatmul.mubr.f32.gmra.mrb[0].mxu0 %v840
        %v943 = vpop.f32.mrb[0].mxu0
        %v944 = vadd.f32 0.0, %v943
        %v945 = vpop.f32.mrb[0].mxu0
        %946 = vdwg.mxu0
        %v947 = vmul.f32 %v909, %v542
        %v948 = vmul.f32 %v914, %v543
        %v949 = vmul.f32 %v919, %v544
        %v950 = vmul.f32 %v924, %v545
        %v951 = vmul.f32 %v929, %v546
        %v952 = vmul.f32 %v934, %v547
        %v953 = vmul.f32 %v939, %v548
        %v954 = vmul.f32 %v944, %v549
        %v955 = vadd.f32 %v947, %v949
        %v956 = vadd.f32 %v948, %v950
        %v957 = vadd.f32 %v955, %v951
        %v958 = vadd.f32 %v956, %v952
        %v959 = vadd.f32 %v957, %v953
        %v960 = vadd.f32 %v958, %v954
        %v961 = vld [vmem:[%s396] sm:$0xff]
        %v962 = vld [vmem:[%s396 + $0x8] sm:$0xff]
        %v963 = vld [vmem:[%s396 + $0x10] sm:$0xff]
        %v964 = vld [vmem:[%s396 + $0x18] sm:$0xff]
        %v965 = vlaneseq
        %v966 = vshrl.u32 %v965, 7
        %v967 = vsub.s32 3, %v966
        %v968 = vrot.slane %v428, %v967
        %v970 = vsel %vm434, %v959, 0
        %v973 = vsel %vm434, %v960, 0
        %975 = vmatprep.subr.mxu0 0.0
        %976 = vmatpush1.msra.mxu0 %v961
        %977 = vmatprep.subr.mxu0 0.0
        %978 = vmatpush1.msra.mxu0 %v962
        %979 = vmatprep.subr.mxu0 0.0
        %980 = vmatpush1.msra.mxu0 %v963
        %981 = vmatprep.subr.mxu0 0.0
        %982 = vmatpush1.msra.mxu0 %v964
        %983 = vmatprep.subr.mxu0 0.0
        %984 = vmatpush1.msra.mxu0 0.0
        %985 = vmatprep.subr.mxu0 0.0
        %986 = vmatpush1.msra.mxu0 0.0
        %987 = vmatprep.subr.mxu0 0.0
        %988 = vmatpush1.msra.mxu0 0.0
        %989 = vmatprep.subr.mxu0 0.0
        %990 = vmatpush1.msra.mxu0 0.0
        %991 = vmatprep.subr.mxu0 0.0
        %992 = vmatpush1.msra.mxu0 0.0
        %993 = vmatprep.subr.mxu0 0.0
        %994 = vmatpush1.msra.mxu0 0.0
        %995 = vmatprep.subr.mxu0 0.0
        %996 = vmatpush1.msra.mxu0 0.0
        %997 = vmatprep.subr.mxu0 0.0
        %998 = vmatpush1.msra.mxu0 0.0
        %999 = vmatprep.subr.mxu0 0.0
        %1000 = vmatpush1.msra.mxu0 0.0
        %1001 = vmatprep.subr.mxu0 0.0
        %1002 = vmatpush1.msra.mxu0 0.0
        %1003 = vmatprep.subr.mxu0 0.0
        %1004 = vmatpush1.msra.mxu0 0.0
        %1005 = vmatprep.subr.mxu0 0.0
        %1006 = vmatpush1.msra.mxu0 0.0
        %1007 = vmatprep.subr.mxu0 0.0
        %1008 = vmatpush1.msra.mxu0 0.0
        %1009 = vmatprep.subr.mxu0 0.0
        %1010 = vmatpush1.msra.mxu0 0.0
        %1011 = vmatprep.subr.mxu0 0.0
        %1012 = vmatpush1.msra.mxu0 0.0
        %1013 = vmatprep.subr.mxu0 0.0
        %1014 = vmatpush1.msra.mxu0 0.0
        %1015 = vmatprep.subr.mxu0 0.0
        %1016 = vmatpush1.msra.mxu0 0.0
        %1017 = vmatprep.subr.mxu0 0.0
        %1018 = vmatpush1.msra.mxu0 0.0
        %1019 = vmatprep.subr.mxu0 0.0
        %1020 = vmatpush1.msra.mxu0 0.0
        %1021 = vmatprep.subr.mxu0 0.0
        %1022 = vmatpush1.msra.mxu0 0.0
        %1023 = vmatprep.subr.mxu0 0.0
        %1024 = vmatpush1.msra.mxu0 0.0
        %1025 = vmatprep.subr.mxu0 0.0
        %1026 = vmatpush1.msra.mxu0 0.0
        %1027 = vmatprep.subr.mxu0 0.0
        %1028 = vmatpush1.msra.mxu0 0.0
        %1029 = vmatprep.subr.mxu0 0.0
        %1030 = vmatpush1.msra.mxu0 0.0
        %1031 = vmatprep.subr.mxu0 0.0
        %1032 = vmatpush1.msra.mxu0 0.0
        %1033 = vmatprep.subr.mxu0 0.0
        %1034 = vmatpush1.msra.mxu0 0.0
        %1035 = vmatprep.subr.mxu0 0.0
        %1036 = vmatpush1.msra.mxu0 0.0
        %1037 = vmatprep.subr.mxu0 0.0
        %1038 = vmatpush1.msra.mxu0 0.0
        %1039 = vmatprep.mubr.f32.mxu0 0.0
        %1040 = vmatmul.mubr.f32.gmra.mrb[0].mxu0 %v970
        %v1041 = vpop.f32.mrb[0].mxu0
        %v1042 = vadd.f32 %v968, %v1041
        %v1043 = vpop.f32.mrb[0].mxu0
        %1044 = vmatprep.mubr.f32.mxu0 0.0
        %1045 = vmatmul.mubr.f32.gmra.mrb[0].mxu0 %v973
        %v1046 = vpop.f32.mrb[0].mxu0
        %v1047 = vadd.f32 %v968, %v1046
        %v1048 = vpop.f32.mrb[0].mxu0
        %1049 = vdwg.mxu0
        %v1050 = vadd.f32 %v426, %v1042
        %v1051 = vadd.f32 %v427, %v1047
        %v1052 = vsel %vm434, %v1050, 0.0
        %1053 = vadd.xlane.f32.xlu0 %v1052
        %v1054 = vpop.xlane.xlu0 %1053
        %v1055 = vsel %vm434, %v1051, 0.0
        %1056 = vadd.xlane.f32.xlu0 %v1055
        %v1057 = vpop.xlane.xlu0 %1056
        %v1058 = vmul.f32 %v1054, 0.03125
        %v1059 = vmul.f32 %v1057, 0.03125
        %v1060 = vsub.f32 %v1050, %v1058
        %v1061 = vsub.f32 %v1051, %v1059
        %v1062 = vmul.f32 %v1060, %v1060
        %v1063 = vmul.f32 %v1061, %v1061
        %v1064 = vsel %vm434, %v1062, 0.0
        %1065 = vadd.xlane.f32.xlu0 %v1064
        %v1066 = vpop.xlane.xlu0 %1065
        %v1067 = vsel %vm434, %v1063, 0.0
        %1068 = vadd.xlane.f32.xlu0 %v1067
        %v1069 = vpop.xlane.xlu0 %1068
        %v1070 = vmul.f32 %v1066, 0.03125
        %v1071 = vmul.f32 %v1069, 0.03125
        %v1072 = vadd.f32 %v1070, 1e-05
        %v1073 = vadd.f32 %v1071, 1e-05
        %v1074 = vrsqrt.pop %v1072
        %v1075 = vrsqrt.pop %v1073
        %v1076 = vmul.f32 %v1060, %v1074
        %v1077 = vmul.f32 %v1061, %v1075
        %v1078 = vlaneseq
        %v1079 = vshrl.u32 %v1078, 7
        %v1080 = vsub.s32 4, %v1079
        %v1081 = vrot.slane %v428, %v1080
        %v1082 = vmul.f32 %v1076, %v1081
        %v1083 = vmul.f32 %v1077, %v1081
        %v1084 = vlaneseq
        %v1085 = vshrl.u32 %v1084, 7
        %v1086 = vsub.s32 5, %v1085
        %v1087 = vrot.slane %v428, %v1086
        %v1088 = vadd.f32 %v1082, %v1087
        %v1089 = vadd.f32 %v1083, %v1087
        %v1090 = vpack.c.bf16 %v1089, %v1088
        %v1091 = vld [vmem:[%s406] sm:$0xff]
        %v1092 = vld [vmem:[%s406 + $0x8] sm:$0xff]
        %v1093 = vld [vmem:[%s406 + $0x10] sm:$0xff]
        %v1094 = vld [vmem:[%s406 + $0x18] sm:$0xff]
        %v1095 = vld [vmem:[%s406 + $0x20] sm:$0xff]
        %v1096 = vld [vmem:[%s406 + $0x28] sm:$0xff]
        %v1097 = vld [vmem:[%s406 + $0x30] sm:$0xff]
        %v1098 = vld [vmem:[%s406 + $0x38] sm:$0xff]
        %v1099 = vld [vmem:[%s406 + $0x40] sm:$0xff]
        %v1100 = vld [vmem:[%s406 + $0x48] sm:$0xff]
        %v1101 = vld [vmem:[%s406 + $0x50] sm:$0xff]
        %v1102 = vld [vmem:[%s406 + $0x58] sm:$0xff]
        %v1103 = vld [vmem:[%s406 + $0x60] sm:$0xff]
        %v1104 = vld [vmem:[%s406 + $0x68] sm:$0xff]
        %v1105 = vld [vmem:[%s406 + $0x70] sm:$0xff]
        %v1106 = vld [vmem:[%s406 + $0x78] sm:$0xff]
        %v1107 = vld [vmem:[%s406 + $0x80] sm:$0xff]
        %v1108 = vld [vmem:[%s406 + $0x88] sm:$0xff]
        %v1109 = vld [vmem:[%s406 + $0x90] sm:$0xff]
        %v1110 = vld [vmem:[%s406 + $0x98] sm:$0xff]
        %v1111 = vld [vmem:[%s406 + $0xa0] sm:$0xff]
        %v1112 = vld [vmem:[%s406 + $0xa8] sm:$0xff]
        %v1113 = vld [vmem:[%s406 + $0xb0] sm:$0xff]
        %v1114 = vld [vmem:[%s406 + $0xb8] sm:$0xff]
        %v1115 = vld [vmem:[%s406 + $0xc0] sm:$0xff]
        %v1116 = vld [vmem:[%s406 + $0xc8] sm:$0xff]
        %v1117 = vld [vmem:[%s406 + $0xd0] sm:$0xff]
        %v1118 = vld [vmem:[%s406 + $0xd8] sm:$0xff]
        %v1119 = vld [vmem:[%s406 + $0xe0] sm:$0xff]
        %v1120 = vld [vmem:[%s406 + $0xe8] sm:$0xff]
        %v1121 = vld [vmem:[%s406 + $0xf0] sm:$0xff]
        %v1122 = vld [vmem:[%s406 + $0xf8] sm:$0xff]
        %v1123 = vld [vmem:[%s410] sm:$0xff]
        %v1124 = vld [vmem:[%s410 + $0x8] sm:$0xff]
        %v1127 = vlaneseq
        %v1128 = vshrl.u32 %v1127, 7
        %v1129 = vsub.s32 0, %v1128
        %v1130 = vrot.slane %v1123, %v1129
        %v1131 = vlaneseq
        %v1132 = vshrl.u32 %v1131, 7
        %v1133 = vsub.s32 1, %v1132
        %v1134 = vrot.slane %v1123, %v1133
        %v1135 = vlaneseq
        %v1136 = vshrl.u32 %v1135, 7
        %v1137 = vsub.s32 2, %v1136
        %v1138 = vrot.slane %v1123, %v1137
        %v1139 = vlaneseq
        %v1140 = vshrl.u32 %v1139, 7
        %v1141 = vsub.s32 3, %v1140
        %v1142 = vrot.slane %v1123, %v1141
        %v1143 = vlaneseq
        %v1144 = vshrl.u32 %v1143, 7
        %v1145 = vsub.s32 4, %v1144
        %v1146 = vrot.slane %v1123, %v1145
        %v1147 = vlaneseq
        %v1148 = vshrl.u32 %v1147, 7
        %v1149 = vsub.s32 5, %v1148
        %v1150 = vrot.slane %v1123, %v1149
        %v1151 = vlaneseq
        %v1152 = vshrl.u32 %v1151, 7
        %v1153 = vsub.s32 6, %v1152
        %v1154 = vrot.slane %v1123, %v1153
        %v1155 = vlaneseq
        %v1156 = vshrl.u32 %v1155, 7
        %v1157 = vsub.s32 7, %v1156
        %v1158 = vrot.slane %v1123, %v1157
        %v1159 = vlaneseq
        %v1160 = vshrl.u32 %v1159, 7
        %v1161 = vsub.s32 0, %v1160
        %v1162 = vrot.slane %v1124, %v1161
        %v1163 = vlaneseq
        %v1164 = vshrl.u32 %v1163, 7
        %v1165 = vsub.s32 1, %v1164
        %v1166 = vrot.slane %v1124, %v1165
        %v1167 = vlaneseq
        %v1168 = vshrl.u32 %v1167, 7
        %v1169 = vsub.s32 2, %v1168
        %v1170 = vrot.slane %v1124, %v1169
        %v1171 = vlaneseq
        %v1172 = vshrl.u32 %v1171, 7
        %v1173 = vsub.s32 3, %v1172
        %v1174 = vrot.slane %v1124, %v1173
        %v1175 = vlaneseq
        %v1176 = vshrl.u32 %v1175, 7
        %v1177 = vsub.s32 4, %v1176
        %v1178 = vrot.slane %v1124, %v1177
        %v1179 = vlaneseq
        %v1180 = vshrl.u32 %v1179, 7
        %v1181 = vsub.s32 5, %v1180
        %v1182 = vrot.slane %v1124, %v1181
        %v1183 = vlaneseq
        %v1184 = vshrl.u32 %v1183, 7
        %v1185 = vsub.s32 6, %v1184
        %v1186 = vrot.slane %v1124, %v1185
        %v1187 = vlaneseq
        %v1188 = vshrl.u32 %v1187, 7
        %v1189 = vsub.s32 7, %v1188
        %v1190 = vrot.slane %v1124, %v1189
        %v1239 = vunpack.c.l.b16 %v1091
        %v1240 = vunpack.c.h.b16 %v1091
        %v1241 = vunpack.c.l.b16 %v1092
        %v1242 = vunpack.c.h.b16 %v1092
        %v1243 = vunpack.c.l.b16 %v1093
        %v1244 = vunpack.c.h.b16 %v1093
        %v1245 = vunpack.c.l.b16 %v1094
        %v1246 = vunpack.c.h.b16 %v1094
        %v1247 = vunpack.c.l.b16 %v1095
        %v1248 = vunpack.c.h.b16 %v1095
        %v1249 = vunpack.c.l.b16 %v1096
        %v1250 = vunpack.c.h.b16 %v1096
        %v1251 = vunpack.c.l.b16 %v1097
        %v1252 = vunpack.c.h.b16 %v1097
        %v1253 = vunpack.c.l.b16 %v1098
        %v1254 = vunpack.c.h.b16 %v1098
        %v1255 = vunpack.c.l.b16 %v1099
        %v1256 = vunpack.c.h.b16 %v1099
        %v1257 = vunpack.c.l.b16 %v1100
        %v1258 = vunpack.c.h.b16 %v1100
        %v1259 = vunpack.c.l.b16 %v1101
        %v1260 = vunpack.c.h.b16 %v1101
        %v1261 = vunpack.c.l.b16 %v1102
        %v1262 = vunpack.c.h.b16 %v1102
        %v1263 = vunpack.c.l.b16 %v1103
        %v1264 = vunpack.c.h.b16 %v1103
        %v1265 = vunpack.c.l.b16 %v1104
        %v1266 = vunpack.c.h.b16 %v1104
        %v1267 = vunpack.c.l.b16 %v1105
        %v1268 = vunpack.c.h.b16 %v1105
        %v1269 = vunpack.c.l.b16 %v1106
        %v1270 = vunpack.c.h.b16 %v1106
        %v1271 = vunpack.c.l.b16 %v1107
        %v1272 = vunpack.c.h.b16 %v1107
        %v1273 = vunpack.c.l.b16 %v1108
        %v1274 = vunpack.c.h.b16 %v1108
        %v1275 = vunpack.c.l.b16 %v1109
        %v1276 = vunpack.c.h.b16 %v1109
        %v1277 = vunpack.c.l.b16 %v1110
        %v1278 = vunpack.c.h.b16 %v1110
        %v1279 = vunpack.c.l.b16 %v1111
        %v1280 = vunpack.c.h.b16 %v1111
        %v1281 = vunpack.c.l.b16 %v1112
        %v1282 = vunpack.c.h.b16 %v1112
        %v1283 = vunpack.c.l.b16 %v1113
        %v1284 = vunpack.c.h.b16 %v1113
        %v1285 = vunpack.c.l.b16 %v1114
        %v1286 = vunpack.c.h.b16 %v1114
        %v1287 = vunpack.c.l.b16 %v1115
        %v1288 = vunpack.c.h.b16 %v1115
        %v1289 = vunpack.c.l.b16 %v1116
        %v1290 = vunpack.c.h.b16 %v1116
        %v1291 = vunpack.c.l.b16 %v1117
        %v1292 = vunpack.c.h.b16 %v1117
        %v1293 = vunpack.c.l.b16 %v1118
        %v1294 = vunpack.c.h.b16 %v1118
        %v1295 = vunpack.c.l.b16 %v1119
        %v1296 = vunpack.c.h.b16 %v1119
        %v1297 = vunpack.c.l.b16 %v1120
        %v1298 = vunpack.c.h.b16 %v1120
        %v1299 = vunpack.c.l.b16 %v1121
        %v1300 = vunpack.c.h.b16 %v1121
        %v1301 = vunpack.c.l.b16 %v1122
        %v1302 = vunpack.c.h.b16 %v1122
        %v1303 = vpack.c.b16 %v1255, %v1239
        %v1304 = vpack.c.b16 %v1256, %v1240
        %v1305 = vpack.c.b16 %v1257, %v1241
        %v1306 = vpack.c.b16 %v1258, %v1242
        %v1307 = vpack.c.b16 %v1259, %v1243
        %v1308 = vpack.c.b16 %v1260, %v1244
        %v1309 = vpack.c.b16 %v1261, %v1245
        %v1310 = vpack.c.b16 %v1262, %v1246
        %v1311 = vpack.c.b16 %v1263, %v1247
        %v1312 = vpack.c.b16 %v1264, %v1248
        %v1313 = vpack.c.b16 %v1265, %v1249
        %v1314 = vpack.c.b16 %v1266, %v1250
        %v1315 = vpack.c.b16 %v1267, %v1251
        %v1316 = vpack.c.b16 %v1268, %v1252
        %v1317 = vpack.c.b16 %v1269, %v1253
        %v1318 = vpack.c.b16 %v1270, %v1254
        %v1319 = vpack.c.b16 %v1287, %v1271
        %v1320 = vpack.c.b16 %v1288, %v1272
        %v1321 = vpack.c.b16 %v1289, %v1273
        %v1322 = vpack.c.b16 %v1290, %v1274
        %v1323 = vpack.c.b16 %v1291, %v1275
        %v1324 = vpack.c.b16 %v1292, %v1276
        %v1325 = vpack.c.b16 %v1293, %v1277
        %v1326 = vpack.c.b16 %v1294, %v1278
        %v1327 = vpack.c.b16 %v1295, %v1279
        %v1328 = vpack.c.b16 %v1296, %v1280
        %v1329 = vpack.c.b16 %v1297, %v1281
        %v1330 = vpack.c.b16 %v1298, %v1282
        %v1331 = vpack.c.b16 %v1299, %v1283
        %v1332 = vpack.c.b16 %v1300, %v1284
        %v1333 = vpack.c.b16 %v1301, %v1285
        %v1334 = vpack.c.b16 %v1302, %v1286
        %v1368 = vsel %vm434, %v1090, 0
        %1370 = vmatprep.subr.bf16.mxu0 %v1304
        %1371 = vmatpush1.bf16.msra.mxu0 %v1303
        %1372 = vmatprep.subr.bf16.mxu0 %v1320
        %1373 = vmatpush1.bf16.msra.mxu0 %v1319
        %1374 = vmatprep.subr.bf16.mxu0 0
        %1375 = vmatpush1.bf16.msra.mxu0 0
        %1376 = vmatprep.subr.bf16.mxu0 0
        %1377 = vmatpush1.bf16.msra.mxu0 0
        %1378 = vmatprep.subr.bf16.mxu0 0
        %1379 = vmatpush1.bf16.msra.mxu0 0
        %1380 = vmatprep.subr.bf16.mxu0 0
        %1381 = vmatpush1.bf16.msra.mxu0 0
        %1382 = vmatprep.subr.bf16.mxu0 0
        %1383 = vmatpush1.bf16.msra.mxu0 0
        %1384 = vmatprep.subr.bf16.mxu0 0
        %1385 = vmatpush1.bf16.msra.mxu0 0
        %1386 = vmatprep.subr.bf16.mxu0 0
        %1387 = vmatpush1.bf16.msra.mxu0 0
        %1388 = vmatprep.subr.bf16.mxu0 0
        %1389 = vmatpush1.bf16.msra.mxu0 0
        %1390 = vmatprep.subr.bf16.mxu0 0
        %1391 = vmatpush1.bf16.msra.mxu0 0
        %1392 = vmatprep.subr.bf16.mxu0 0
        %1393 = vmatpush1.bf16.msra.mxu0 0
        %1394 = vmatprep.subr.bf16.mxu0 0
        %1395 = vmatpush1.bf16.msra.mxu0 0
        %1396 = vmatprep.subr.bf16.mxu0 0
        %1397 = vmatpush1.bf16.msra.mxu0 0
        %1398 = vmatprep.subr.bf16.mxu0 0
        %1399 = vmatpush1.bf16.msra.mxu0 0
        %1400 = vmatprep.subr.bf16.mxu0 0
        %1401 = vmatpush1.bf16.msra.mxu0 0
        %1402 = vmatprep.mubr.bf16.mxu0 0
        %1403 = vmatmul.mubr.bf16.gmra.mrb[0].mxu0 %v1368
        %v1404 = vpop.f32.mrb[0].mxu0
        %v1405 = vadd.f32 %v1130, %v1404
        %v1406 = vpop.f32.mrb[0].mxu0
        %v1407 = vadd.f32 %v1134, %v1406
        %v1408 = vpop.f32.mrb[0].mxu0
        %v1409 = vadd.f32 %v1130, %v1408
        %v1410 = vpop.f32.mrb[0].mxu0
        %v1411 = vadd.f32 %v1134, %v1410
        %1412 = vdwg.mxu0
        %1413 = vmatprep.subr.bf16.mxu0 %v1306
        %1414 = vmatpush1.bf16.msra.mxu0 %v1305
        %1415 = vmatprep.subr.bf16.mxu0 %v1322
        %1416 = vmatpush1.bf16.msra.mxu0 %v1321
        %1417 = vmatprep.subr.bf16.mxu0 0
        %1418 = vmatpush1.bf16.msra.mxu0 0
        %1419 = vmatprep.subr.bf16.mxu0 0
        %1420 = vmatpush1.bf16.msra.mxu0 0
        %1421 = vmatprep.subr.bf16.mxu0 0
        %1422 = vmatpush1.bf16.msra.mxu0 0
        %1423 = vmatprep.subr.bf16.mxu0 0
        %1424 = vmatpush1.bf16.msra.mxu0 0
        %1425 = vmatprep.subr.bf16.mxu0 0
        %1426 = vmatpush1.bf16.msra.mxu0 0
        %1427 = vmatprep.subr.bf16.mxu0 0
        %1428 = vmatpush1.bf16.msra.mxu0 0
        %1429 = vmatprep.subr.bf16.mxu0 0
        %1430 = vmatpush1.bf16.msra.mxu0 0
        %1431 = vmatprep.subr.bf16.mxu0 0
        %1432 = vmatpush1.bf16.msra.mxu0 0
        %1433 = vmatprep.subr.bf16.mxu0 0
        %1434 = vmatpush1.bf16.msra.mxu0 0
        %1435 = vmatprep.subr.bf16.mxu0 0
        %1436 = vmatpush1.bf16.msra.mxu0 0
        %1437 = vmatprep.subr.bf16.mxu0 0
        %1438 = vmatpush1.bf16.msra.mxu0 0
        %1439 = vmatprep.subr.bf16.mxu0 0
        %1440 = vmatpush1.bf16.msra.mxu0 0
        %1441 = vmatprep.subr.bf16.mxu0 0
        %1442 = vmatpush1.bf16.msra.mxu0 0
        %1443 = vmatprep.subr.bf16.mxu0 0
        %1444 = vmatpush1.bf16.msra.mxu0 0
        %1445 = vmatprep.mubr.bf16.mxu0 0
        %1446 = vmatmul.mubr.bf16.gmra.mrb[0].mxu0 %v1368
        %v1447 = vpop.f32.mrb[0].mxu0
        %v1448 = vadd.f32 %v1138, %v1447
        %v1449 = vpop.f32.mrb[0].mxu0
        %v1450 = vadd.f32 %v1142, %v1449
        %v1451 = vpop.f32.mrb[0].mxu0
        %v1452 = vadd.f32 %v1138, %v1451
        %v1453 = vpop.f32.mrb[0].mxu0
        %v1454 = vadd.f32 %v1142, %v1453
        %1455 = vdwg.mxu0
        %1456 = vmatprep.subr.bf16.mxu0 %v1308
        %1457 = vmatpush1.bf16.msra.mxu0 %v1307
        %1458 = vmatprep.subr.bf16.mxu0 %v1324
        %1459 = vmatpush1.bf16.msra.mxu0 %v1323
        %1460 = vmatprep.subr.bf16.mxu0 0
        %1461 = vmatpush1.bf16.msra.mxu0 0
        %1462 = vmatprep.subr.bf16.mxu0 0
        %1463 = vmatpush1.bf16.msra.mxu0 0
        %1464 = vmatprep.subr.bf16.mxu0 0
        %1465 = vmatpush1.bf16.msra.mxu0 0
        %1466 = vmatprep.subr.bf16.mxu0 0
        %1467 = vmatpush1.bf16.msra.mxu0 0
        %1468 = vmatprep.subr.bf16.mxu0 0
        %1469 = vmatpush1.bf16.msra.mxu0 0
        %1470 = vmatprep.subr.bf16.mxu0 0
        %1471 = vmatpush1.bf16.msra.mxu0 0
        %1472 = vmatprep.subr.bf16.mxu0 0
        %1473 = vmatpush1.bf16.msra.mxu0 0
        %1474 = vmatprep.subr.bf16.mxu0 0
        %1475 = vmatpush1.bf16.msra.mxu0 0
        %1476 = vmatprep.subr.bf16.mxu0 0
        %1477 = vmatpush1.bf16.msra.mxu0 0
        %1478 = vmatprep.subr.bf16.mxu0 0
        %1479 = vmatpush1.bf16.msra.mxu0 0
        %1480 = vmatprep.subr.bf16.mxu0 0
        %1481 = vmatpush1.bf16.msra.mxu0 0
        %1482 = vmatprep.subr.bf16.mxu0 0
        %1483 = vmatpush1.bf16.msra.mxu0 0
        %1484 = vmatprep.subr.bf16.mxu0 0
        %1485 = vmatpush1.bf16.msra.mxu0 0
        %1486 = vmatprep.subr.bf16.mxu0 0
        %1487 = vmatpush1.bf16.msra.mxu0 0
        %1488 = vmatprep.mubr.bf16.mxu0 0
        %1489 = vmatmul.mubr.bf16.gmra.mrb[0].mxu0 %v1368
        %v1490 = vpop.f32.mrb[0].mxu0
        %v1491 = vadd.f32 %v1146, %v1490
        %v1492 = vpop.f32.mrb[0].mxu0
        %v1493 = vadd.f32 %v1150, %v1492
        %v1494 = vpop.f32.mrb[0].mxu0
        %v1495 = vadd.f32 %v1146, %v1494
        %v1496 = vpop.f32.mrb[0].mxu0
        %v1497 = vadd.f32 %v1150, %v1496
        %1498 = vdwg.mxu0
        %1499 = vmatprep.subr.bf16.mxu0 %v1310
        %1500 = vmatpush1.bf16.msra.mxu0 %v1309
        %1501 = vmatprep.subr.bf16.mxu0 %v1326
        %1502 = vmatpush1.bf16.msra.mxu0 %v1325
        %1503 = vmatprep.subr.bf16.mxu0 0
        %1504 = vmatpush1.bf16.msra.mxu0 0
        %1505 = vmatprep.subr.bf16.mxu0 0
        %1506 = vmatpush1.bf16.msra.mxu0 0
        %1507 = vmatprep.subr.bf16.mxu0 0
        %1508 = vmatpush1.bf16.msra.mxu0 0
        %1509 = vmatprep.subr.bf16.mxu0 0
        %1510 = vmatpush1.bf16.msra.mxu0 0
        %1511 = vmatprep.subr.bf16.mxu0 0
        %1512 = vmatpush1.bf16.msra.mxu0 0
        %1513 = vmatprep.subr.bf16.mxu0 0
        %1514 = vmatpush1.bf16.msra.mxu0 0
        %1515 = vmatprep.subr.bf16.mxu0 0
        %1516 = vmatpush1.bf16.msra.mxu0 0
        %1517 = vmatprep.subr.bf16.mxu0 0
        %1518 = vmatpush1.bf16.msra.mxu0 0
        %1519 = vmatprep.subr.bf16.mxu0 0
        %1520 = vmatpush1.bf16.msra.mxu0 0
        %1521 = vmatprep.subr.bf16.mxu0 0
        %1522 = vmatpush1.bf16.msra.mxu0 0
        %1523 = vmatprep.subr.bf16.mxu0 0
        %1524 = vmatpush1.bf16.msra.mxu0 0
        %1525 = vmatprep.subr.bf16.mxu0 0
        %1526 = vmatpush1.bf16.msra.mxu0 0
        %1527 = vmatprep.subr.bf16.mxu0 0
        %1528 = vmatpush1.bf16.msra.mxu0 0
        %1529 = vmatprep.subr.bf16.mxu0 0
        %1530 = vmatpush1.bf16.msra.mxu0 0
        %1531 = vmatprep.mubr.bf16.mxu0 0
        %1532 = vmatmul.mubr.bf16.gmra.mrb[0].mxu0 %v1368
        %v1533 = vpop.f32.mrb[0].mxu0
        %v1534 = vadd.f32 %v1154, %v1533
        %v1535 = vpop.f32.mrb[0].mxu0
        %v1536 = vadd.f32 %v1158, %v1535
        %v1537 = vpop.f32.mrb[0].mxu0
        %v1538 = vadd.f32 %v1154, %v1537
        %v1539 = vpop.f32.mrb[0].mxu0
        %v1540 = vadd.f32 %v1158, %v1539
        %1541 = vdwg.mxu0
        %1542 = vmatprep.subr.bf16.mxu0 %v1312
        %1543 = vmatpush1.bf16.msra.mxu0 %v1311
        %1544 = vmatprep.subr.bf16.mxu0 %v1328
        %1545 = vmatpush1.bf16.msra.mxu0 %v1327
        %1546 = vmatprep.subr.bf16.mxu0 0
        %1547 = vmatpush1.bf16.msra.mxu0 0
        %1548 = vmatprep.subr.bf16.mxu0 0
        %1549 = vmatpush1.bf16.msra.mxu0 0
        %1550 = vmatprep.subr.bf16.mxu0 0
        %1551 = vmatpush1.bf16.msra.mxu0 0
        %1552 = vmatprep.subr.bf16.mxu0 0
        %1553 = vmatpush1.bf16.msra.mxu0 0
        %1554 = vmatprep.subr.bf16.mxu0 0
        %1555 = vmatpush1.bf16.msra.mxu0 0
        %1556 = vmatprep.subr.bf16.mxu0 0
        %1557 = vmatpush1.bf16.msra.mxu0 0
        %1558 = vmatprep.subr.bf16.mxu0 0
        %1559 = vmatpush1.bf16.msra.mxu0 0
        %1560 = vmatprep.subr.bf16.mxu0 0
        %1561 = vmatpush1.bf16.msra.mxu0 0
        %1562 = vmatprep.subr.bf16.mxu0 0
        %1563 = vmatpush1.bf16.msra.mxu0 0
        %1564 = vmatprep.subr.bf16.mxu0 0
        %1565 = vmatpush1.bf16.msra.mxu0 0
        %1566 = vmatprep.subr.bf16.mxu0 0
        %1567 = vmatpush1.bf16.msra.mxu0 0
        %1568 = vmatprep.subr.bf16.mxu0 0
        %1569 = vmatpush1.bf16.msra.mxu0 0
        %1570 = vmatprep.subr.bf16.mxu0 0
        %1571 = vmatpush1.bf16.msra.mxu0 0
        %1572 = vmatprep.subr.bf16.mxu0 0
        %1573 = vmatpush1.bf16.msra.mxu0 0
        %1574 = vmatprep.mubr.bf16.mxu0 0
        %1575 = vmatmul.mubr.bf16.gmra.mrb[0].mxu0 %v1368
        %v1576 = vpop.f32.mrb[0].mxu0
        %v1577 = vadd.f32 %v1162, %v1576
        %v1578 = vpop.f32.mrb[0].mxu0
        %v1579 = vadd.f32 %v1166, %v1578
        %v1580 = vpop.f32.mrb[0].mxu0
        %v1581 = vadd.f32 %v1162, %v1580
        %v1582 = vpop.f32.mrb[0].mxu0
        %v1583 = vadd.f32 %v1166, %v1582
        %1584 = vdwg.mxu0
        %1585 = vmatprep.subr.bf16.mxu0 %v1314
        %1586 = vmatpush1.bf16.msra.mxu0 %v1313
        %1587 = vmatprep.subr.bf16.mxu0 %v1330
        %1588 = vmatpush1.bf16.msra.mxu0 %v1329
        %1589 = vmatprep.subr.bf16.mxu0 0
        %1590 = vmatpush1.bf16.msra.mxu0 0
        %1591 = vmatprep.subr.bf16.mxu0 0
        %1592 = vmatpush1.bf16.msra.mxu0 0
        %1593 = vmatprep.subr.bf16.mxu0 0
        %1594 = vmatpush1.bf16.msra.mxu0 0
        %1595 = vmatprep.subr.bf16.mxu0 0
        %1596 = vmatpush1.bf16.msra.mxu0 0
        %1597 = vmatprep.subr.bf16.mxu0 0
        %1598 = vmatpush1.bf16.msra.mxu0 0
        %1599 = vmatprep.subr.bf16.mxu0 0
        %1600 = vmatpush1.bf16.msra.mxu0 0
        %1601 = vmatprep.subr.bf16.mxu0 0
        %1602 = vmatpush1.bf16.msra.mxu0 0
        %1603 = vmatprep.subr.bf16.mxu0 0
        %1604 = vmatpush1.bf16.msra.mxu0 0
        %1605 = vmatprep.subr.bf16.mxu0 0
        %1606 = vmatpush1.bf16.msra.mxu0 0
        %1607 = vmatprep.subr.bf16.mxu0 0
        %1608 = vmatpush1.bf16.msra.mxu0 0
        %1609 = vmatprep.subr.bf16.mxu0 0
        %1610 = vmatpush1.bf16.msra.mxu0 0
        %1611 = vmatprep.subr.bf16.mxu0 0
        %1612 = vmatpush1.bf16.msra.mxu0 0
        %1613 = vmatprep.subr.bf16.mxu0 0
        %1614 = vmatpush1.bf16.msra.mxu0 0
        %1615 = vmatprep.subr.bf16.mxu0 0
        %1616 = vmatpush1.bf16.msra.mxu0 0
        %1617 = vmatprep.mubr.bf16.mxu0 0
        %1618 = vmatmul.mubr.bf16.gmra.mrb[0].mxu0 %v1368
        %v1619 = vpop.f32.mrb[0].mxu0
        %v1620 = vadd.f32 %v1170, %v1619
        %v1621 = vpop.f32.mrb[0].mxu0
        %v1622 = vadd.f32 %v1174, %v1621
        %v1623 = vpop.f32.mrb[0].mxu0
        %v1624 = vadd.f32 %v1170, %v1623
        %v1625 = vpop.f32.mrb[0].mxu0
        %v1626 = vadd.f32 %v1174, %v1625
        %1627 = vdwg.mxu0
        %1628 = vmatprep.subr.bf16.mxu0 %v1316
        %1629 = vmatpush1.bf16.msra.mxu0 %v1315
        %1630 = vmatprep.subr.bf16.mxu0 %v1332
        %1631 = vmatpush1.bf16.msra.mxu0 %v1331
        %1632 = vmatprep.subr.bf16.mxu0 0
        %1633 = vmatpush1.bf16.msra.mxu0 0
        %1634 = vmatprep.subr.bf16.mxu0 0
        %1635 = vmatpush1.bf16.msra.mxu0 0
        %1636 = vmatprep.subr.bf16.mxu0 0
        %1637 = vmatpush1.bf16.msra.mxu0 0
        %1638 = vmatprep.subr.bf16.mxu0 0
        %1639 = vmatpush1.bf16.msra.mxu0 0
        %1640 = vmatprep.subr.bf16.mxu0 0
        %1641 = vmatpush1.bf16.msra.mxu0 0
        %1642 = vmatprep.subr.bf16.mxu0 0
        %1643 = vmatpush1.bf16.msra.mxu0 0
        %1644 = vmatprep.subr.bf16.mxu0 0
        %1645 = vmatpush1.bf16.msra.mxu0 0
        %1646 = vmatprep.subr.bf16.mxu0 0
        %1647 = vmatpush1.bf16.msra.mxu0 0
        %1648 = vmatprep.subr.bf16.mxu0 0
        %1649 = vmatpush1.bf16.msra.mxu0 0
        %1650 = vmatprep.subr.bf16.mxu0 0
        %1651 = vmatpush1.bf16.msra.mxu0 0
        %1652 = vmatprep.subr.bf16.mxu0 0
        %1653 = vmatpush1.bf16.msra.mxu0 0
        %1654 = vmatprep.subr.bf16.mxu0 0
        %1655 = vmatpush1.bf16.msra.mxu0 0
        %1656 = vmatprep.subr.bf16.mxu0 0
        %1657 = vmatpush1.bf16.msra.mxu0 0
        %1658 = vmatprep.subr.bf16.mxu0 0
        %1659 = vmatpush1.bf16.msra.mxu0 0
        %1660 = vmatprep.mubr.bf16.mxu0 0
        %1661 = vmatmul.mubr.bf16.gmra.mrb[0].mxu0 %v1368
        %v1662 = vpop.f32.mrb[0].mxu0
        %v1663 = vadd.f32 %v1178, %v1662
        %v1664 = vpop.f32.mrb[0].mxu0
        %v1665 = vadd.f32 %v1182, %v1664
        %v1666 = vpop.f32.mrb[0].mxu0
        %v1667 = vadd.f32 %v1178, %v1666
        %v1668 = vpop.f32.mrb[0].mxu0
        %v1669 = vadd.f32 %v1182, %v1668
        %1670 = vdwg.mxu0
        %1671 = vmatprep.subr.bf16.mxu0 %v1318
        %1672 = vmatpush1.bf16.msra.mxu0 %v1317
        %1673 = vmatprep.subr.bf16.mxu0 %v1334
        %1674 = vmatpush1.bf16.msra.mxu0 %v1333
        %1675 = vmatprep.subr.bf16.mxu0 0
        %1676 = vmatpush1.bf16.msra.mxu0 0
        %1677 = vmatprep.subr.bf16.mxu0 0
        %1678 = vmatpush1.bf16.msra.mxu0 0
        %1679 = vmatprep.subr.bf16.mxu0 0
        %1680 = vmatpush1.bf16.msra.mxu0 0
        %1681 = vmatprep.subr.bf16.mxu0 0
        %1682 = vmatpush1.bf16.msra.mxu0 0
        %1683 = vmatprep.subr.bf16.mxu0 0
        %1684 = vmatpush1.bf16.msra.mxu0 0
        %1685 = vmatprep.subr.bf16.mxu0 0
        %1686 = vmatpush1.bf16.msra.mxu0 0
        %1687 = vmatprep.subr.bf16.mxu0 0
        %1688 = vmatpush1.bf16.msra.mxu0 0
        %1689 = vmatprep.subr.bf16.mxu0 0
        %1690 = vmatpush1.bf16.msra.mxu0 0
        %1691 = vmatprep.subr.bf16.mxu0 0
        %1692 = vmatpush1.bf16.msra.mxu0 0
        %1693 = vmatprep.subr.bf16.mxu0 0
        %1694 = vmatpush1.bf16.msra.mxu0 0
        %1695 = vmatprep.subr.bf16.mxu0 0
        %1696 = vmatpush1.bf16.msra.mxu0 0
        %1697 = vmatprep.subr.bf16.mxu0 0
        %1698 = vmatpush1.bf16.msra.mxu0 0
        %1699 = vmatprep.subr.bf16.mxu0 0
        %1700 = vmatpush1.bf16.msra.mxu0 0
        %1701 = vmatprep.subr.bf16.mxu0 0
        %1702 = vmatpush1.bf16.msra.mxu0 0
        %1703 = vmatprep.mubr.bf16.mxu0 0
        %1704 = vmatmul.mubr.bf16.gmra.mrb[0].mxu0 %v1368
        %v1705 = vpop.f32.mrb[0].mxu0
        %v1706 = vadd.f32 %v1186, %v1705
        %v1707 = vpop.f32.mrb[0].mxu0
        %v1708 = vadd.f32 %v1190, %v1707
        %v1709 = vpop.f32.mrb[0].mxu0
        %v1710 = vadd.f32 %v1186, %v1709
        %v1711 = vpop.f32.mrb[0].mxu0
        %v1712 = vadd.f32 %v1190, %v1711
        %1713 = vdwg.mxu0
        %v1714 = vmax.f32 %v1405, 0.0
        %v1715 = vmax.f32 %v1407, 0.0
        %v1716 = vmax.f32 %v1448, 0.0
        %v1717 = vmax.f32 %v1450, 0.0
        %v1718 = vmax.f32 %v1491, 0.0
        %v1719 = vmax.f32 %v1493, 0.0
        %v1720 = vmax.f32 %v1534, 0.0
        %v1721 = vmax.f32 %v1536, 0.0
        %v1722 = vmax.f32 %v1577, 0.0
        %v1723 = vmax.f32 %v1579, 0.0
        %v1724 = vmax.f32 %v1620, 0.0
        %v1725 = vmax.f32 %v1622, 0.0
        %v1726 = vmax.f32 %v1663, 0.0
        %v1727 = vmax.f32 %v1665, 0.0
        %v1728 = vmax.f32 %v1706, 0.0
        %v1729 = vmax.f32 %v1708, 0.0
        %v1730 = vmax.f32 %v1409, 0.0
        %v1731 = vmax.f32 %v1411, 0.0
        %v1732 = vmax.f32 %v1452, 0.0
        %v1733 = vmax.f32 %v1454, 0.0
        %v1734 = vmax.f32 %v1495, 0.0
        %v1735 = vmax.f32 %v1497, 0.0
        %v1736 = vmax.f32 %v1538, 0.0
        %v1737 = vmax.f32 %v1540, 0.0
        %v1738 = vmax.f32 %v1581, 0.0
        %v1739 = vmax.f32 %v1583, 0.0
        %v1740 = vmax.f32 %v1624, 0.0
        %v1741 = vmax.f32 %v1626, 0.0
        %v1742 = vmax.f32 %v1667, 0.0
        %v1743 = vmax.f32 %v1669, 0.0
        %v1744 = vmax.f32 %v1710, 0.0
        %v1745 = vmax.f32 %v1712, 0.0
        %v1746 = vpack.c.bf16 %v1730, %v1714
        %v1747 = vpack.c.bf16 %v1731, %v1715
        %v1748 = vpack.c.bf16 %v1732, %v1716
        %v1749 = vpack.c.bf16 %v1733, %v1717
        %v1750 = vpack.c.bf16 %v1734, %v1718
        %v1751 = vpack.c.bf16 %v1735, %v1719
        %v1752 = vpack.c.bf16 %v1736, %v1720
        %v1753 = vpack.c.bf16 %v1737, %v1721
        %v1754 = vpack.c.bf16 %v1738, %v1722
        %v1755 = vpack.c.bf16 %v1739, %v1723
        %v1756 = vpack.c.bf16 %v1740, %v1724
        %v1757 = vpack.c.bf16 %v1741, %v1725
        %v1758 = vpack.c.bf16 %v1742, %v1726
        %v1759 = vpack.c.bf16 %v1743, %v1727
        %v1760 = vpack.c.bf16 %v1744, %v1728
        %v1761 = vpack.c.bf16 %v1745, %v1729
        %v1762 = vld [vmem:[%s415] sm:$0xf]
        %v1763 = vld [vmem:[%s415 + $0x4] sm:$0xf]
        %v1764 = vld [vmem:[%s415 + $0x8] sm:$0xf]
        %v1765 = vld [vmem:[%s415 + $0xc] sm:$0xf]
        %v1766 = vld [vmem:[%s415 + $0x10] sm:$0xf]
        %v1767 = vld [vmem:[%s415 + $0x14] sm:$0xf]
        %v1768 = vld [vmem:[%s415 + $0x18] sm:$0xf]
        %v1769 = vld [vmem:[%s415 + $0x1c] sm:$0xf]
        %v1770 = vld [vmem:[%s415 + $0x20] sm:$0xf]
        %v1771 = vld [vmem:[%s415 + $0x24] sm:$0xf]
        %v1772 = vld [vmem:[%s415 + $0x28] sm:$0xf]
        %v1773 = vld [vmem:[%s415 + $0x2c] sm:$0xf]
        %v1774 = vld [vmem:[%s415 + $0x30] sm:$0xf]
        %v1775 = vld [vmem:[%s415 + $0x34] sm:$0xf]
        %v1776 = vld [vmem:[%s415 + $0x38] sm:$0xf]
        %v1777 = vld [vmem:[%s415 + $0x3c] sm:$0xf]
        %v1778 = vld [vmem:[%s415 + $0x40] sm:$0xf]
        %v1779 = vld [vmem:[%s415 + $0x44] sm:$0xf]
        %v1780 = vld [vmem:[%s415 + $0x48] sm:$0xf]
        %v1781 = vld [vmem:[%s415 + $0x4c] sm:$0xf]
        %v1782 = vld [vmem:[%s415 + $0x50] sm:$0xf]
        %v1783 = vld [vmem:[%s415 + $0x54] sm:$0xf]
        %v1784 = vld [vmem:[%s415 + $0x58] sm:$0xf]
        %v1785 = vld [vmem:[%s415 + $0x5c] sm:$0xf]
        %v1786 = vld [vmem:[%s415 + $0x60] sm:$0xf]
        %v1787 = vld [vmem:[%s415 + $0x64] sm:$0xf]
        %v1788 = vld [vmem:[%s415 + $0x68] sm:$0xf]
        %v1789 = vld [vmem:[%s415 + $0x6c] sm:$0xf]
        %v1790 = vld [vmem:[%s415 + $0x70] sm:$0xf]
        %v1791 = vld [vmem:[%s415 + $0x74] sm:$0xf]
        %v1792 = vld [vmem:[%s415 + $0x78] sm:$0xf]
        %v1793 = vld [vmem:[%s415 + $0x7c] sm:$0xf]
        %v1794 = vld [vmem:[%s415 + $0x80] sm:$0xf]
        %v1795 = vld [vmem:[%s415 + $0x84] sm:$0xf]
        %v1796 = vld [vmem:[%s415 + $0x88] sm:$0xf]
        %v1797 = vld [vmem:[%s415 + $0x8c] sm:$0xf]
        %v1798 = vld [vmem:[%s415 + $0x90] sm:$0xf]
        %v1799 = vld [vmem:[%s415 + $0x94] sm:$0xf]
        %v1800 = vld [vmem:[%s415 + $0x98] sm:$0xf]
        %v1801 = vld [vmem:[%s415 + $0x9c] sm:$0xf]
        %v1802 = vld [vmem:[%s415 + $0xa0] sm:$0xf]
        %v1803 = vld [vmem:[%s415 + $0xa4] sm:$0xf]
        %v1804 = vld [vmem:[%s415 + $0xa8] sm:$0xf]
        %v1805 = vld [vmem:[%s415 + $0xac] sm:$0xf]
        %v1806 = vld [vmem:[%s415 + $0xb0] sm:$0xf]
        %v1807 = vld [vmem:[%s415 + $0xb4] sm:$0xf]
        %v1808 = vld [vmem:[%s415 + $0xb8] sm:$0xf]
        %v1809 = vld [vmem:[%s415 + $0xbc] sm:$0xf]
        %v1810 = vld [vmem:[%s415 + $0xc0] sm:$0xf]
        %v1811 = vld [vmem:[%s415 + $0xc4] sm:$0xf]
        %v1812 = vld [vmem:[%s415 + $0xc8] sm:$0xf]
        %v1813 = vld [vmem:[%s415 + $0xcc] sm:$0xf]
        %v1814 = vld [vmem:[%s415 + $0xd0] sm:$0xf]
        %v1815 = vld [vmem:[%s415 + $0xd4] sm:$0xf]
        %v1816 = vld [vmem:[%s415 + $0xd8] sm:$0xf]
        %v1817 = vld [vmem:[%s415 + $0xdc] sm:$0xf]
        %v1818 = vld [vmem:[%s415 + $0xe0] sm:$0xf]
        %v1819 = vld [vmem:[%s415 + $0xe4] sm:$0xf]
        %v1820 = vld [vmem:[%s415 + $0xe8] sm:$0xf]
        %v1821 = vld [vmem:[%s415 + $0xec] sm:$0xf]
        %v1822 = vld [vmem:[%s415 + $0xf0] sm:$0xf]
        %v1823 = vld [vmem:[%s415 + $0xf4] sm:$0xf]
        %v1824 = vld [vmem:[%s415 + $0xf8] sm:$0xf]
        %v1825 = vld [vmem:[%s415 + $0xfc] sm:$0xf]
        %v1826 = vld [vmem:[%s415 + $0x100] sm:$0xf]
        %v1827 = vld [vmem:[%s415 + $0x104] sm:$0xf]
        %v1828 = vld [vmem:[%s415 + $0x108] sm:$0xf]
        %v1829 = vld [vmem:[%s415 + $0x10c] sm:$0xf]
        %v1830 = vld [vmem:[%s415 + $0x110] sm:$0xf]
        %v1831 = vld [vmem:[%s415 + $0x114] sm:$0xf]
        %v1832 = vld [vmem:[%s415 + $0x118] sm:$0xf]
        %v1833 = vld [vmem:[%s415 + $0x11c] sm:$0xf]
        %v1834 = vld [vmem:[%s415 + $0x120] sm:$0xf]
        %v1835 = vld [vmem:[%s415 + $0x124] sm:$0xf]
        %v1836 = vld [vmem:[%s415 + $0x128] sm:$0xf]
        %v1837 = vld [vmem:[%s415 + $0x12c] sm:$0xf]
        %v1838 = vld [vmem:[%s415 + $0x130] sm:$0xf]
        %v1839 = vld [vmem:[%s415 + $0x134] sm:$0xf]
        %v1840 = vld [vmem:[%s415 + $0x138] sm:$0xf]
        %v1841 = vld [vmem:[%s415 + $0x13c] sm:$0xf]
        %v1842 = vld [vmem:[%s415 + $0x140] sm:$0xf]
        %v1843 = vld [vmem:[%s415 + $0x144] sm:$0xf]
        %v1844 = vld [vmem:[%s415 + $0x148] sm:$0xf]
        %v1845 = vld [vmem:[%s415 + $0x14c] sm:$0xf]
        %v1846 = vld [vmem:[%s415 + $0x150] sm:$0xf]
        %v1847 = vld [vmem:[%s415 + $0x154] sm:$0xf]
        %v1848 = vld [vmem:[%s415 + $0x158] sm:$0xf]
        %v1849 = vld [vmem:[%s415 + $0x15c] sm:$0xf]
        %v1850 = vld [vmem:[%s415 + $0x160] sm:$0xf]
        %v1851 = vld [vmem:[%s415 + $0x164] sm:$0xf]
        %v1852 = vld [vmem:[%s415 + $0x168] sm:$0xf]
        %v1853 = vld [vmem:[%s415 + $0x16c] sm:$0xf]
        %v1854 = vld [vmem:[%s415 + $0x170] sm:$0xf]
        %v1855 = vld [vmem:[%s415 + $0x174] sm:$0xf]
        %v1856 = vld [vmem:[%s415 + $0x178] sm:$0xf]
        %v1857 = vld [vmem:[%s415 + $0x17c] sm:$0xf]
        %v1858 = vld [vmem:[%s415 + $0x180] sm:$0xf]
        %v1859 = vld [vmem:[%s415 + $0x184] sm:$0xf]
        %v1860 = vld [vmem:[%s415 + $0x188] sm:$0xf]
        %v1861 = vld [vmem:[%s415 + $0x18c] sm:$0xf]
        %v1862 = vld [vmem:[%s415 + $0x190] sm:$0xf]
        %v1863 = vld [vmem:[%s415 + $0x194] sm:$0xf]
        %v1864 = vld [vmem:[%s415 + $0x198] sm:$0xf]
        %v1865 = vld [vmem:[%s415 + $0x19c] sm:$0xf]
        %v1866 = vld [vmem:[%s415 + $0x1a0] sm:$0xf]
        %v1867 = vld [vmem:[%s415 + $0x1a4] sm:$0xf]
        %v1868 = vld [vmem:[%s415 + $0x1a8] sm:$0xf]
        %v1869 = vld [vmem:[%s415 + $0x1ac] sm:$0xf]
        %v1870 = vld [vmem:[%s415 + $0x1b0] sm:$0xf]
        %v1871 = vld [vmem:[%s415 + $0x1b4] sm:$0xf]
        %v1872 = vld [vmem:[%s415 + $0x1b8] sm:$0xf]
        %v1873 = vld [vmem:[%s415 + $0x1bc] sm:$0xf]
        %v1874 = vld [vmem:[%s415 + $0x1c0] sm:$0xf]
        %v1875 = vld [vmem:[%s415 + $0x1c4] sm:$0xf]
        %v1876 = vld [vmem:[%s415 + $0x1c8] sm:$0xf]
        %v1877 = vld [vmem:[%s415 + $0x1cc] sm:$0xf]
        %v1878 = vld [vmem:[%s415 + $0x1d0] sm:$0xf]
        %v1879 = vld [vmem:[%s415 + $0x1d4] sm:$0xf]
        %v1880 = vld [vmem:[%s415 + $0x1d8] sm:$0xf]
        %v1881 = vld [vmem:[%s415 + $0x1dc] sm:$0xf]
        %v1882 = vld [vmem:[%s415 + $0x1e0] sm:$0xf]
        %v1883 = vld [vmem:[%s415 + $0x1e4] sm:$0xf]
        %v1884 = vld [vmem:[%s415 + $0x1e8] sm:$0xf]
        %v1885 = vld [vmem:[%s415 + $0x1ec] sm:$0xf]
        %v1886 = vld [vmem:[%s415 + $0x1f0] sm:$0xf]
        %v1887 = vld [vmem:[%s415 + $0x1f4] sm:$0xf]
        %v1888 = vld [vmem:[%s415 + $0x1f8] sm:$0xf]
        %v1889 = vld [vmem:[%s415 + $0x1fc] sm:$0xf]
        %v1890 = vld [vmem:[%s415 + $0x200] sm:$0xf]
        %v1891 = vld [vmem:[%s415 + $0x204] sm:$0xf]
        %v1892 = vld [vmem:[%s415 + $0x208] sm:$0xf]
        %v1893 = vld [vmem:[%s415 + $0x20c] sm:$0xf]
        %v1894 = vld [vmem:[%s415 + $0x210] sm:$0xf]
        %v1895 = vld [vmem:[%s415 + $0x214] sm:$0xf]
        %v1896 = vld [vmem:[%s415 + $0x218] sm:$0xf]
        %v1897 = vld [vmem:[%s415 + $0x21c] sm:$0xf]
        %v1898 = vld [vmem:[%s415 + $0x220] sm:$0xf]
        %v1899 = vld [vmem:[%s415 + $0x224] sm:$0xf]
        %v1900 = vld [vmem:[%s415 + $0x228] sm:$0xf]
        %v1901 = vld [vmem:[%s415 + $0x22c] sm:$0xf]
        %v1902 = vld [vmem:[%s415 + $0x230] sm:$0xf]
        %v1903 = vld [vmem:[%s415 + $0x234] sm:$0xf]
        %v1904 = vld [vmem:[%s415 + $0x238] sm:$0xf]
        %v1905 = vld [vmem:[%s415 + $0x23c] sm:$0xf]
        %v1906 = vld [vmem:[%s415 + $0x240] sm:$0xf]
        %v1907 = vld [vmem:[%s415 + $0x244] sm:$0xf]
        %v1908 = vld [vmem:[%s415 + $0x248] sm:$0xf]
        %v1909 = vld [vmem:[%s415 + $0x24c] sm:$0xf]
        %v1910 = vld [vmem:[%s415 + $0x250] sm:$0xf]
        %v1911 = vld [vmem:[%s415 + $0x254] sm:$0xf]
        %v1912 = vld [vmem:[%s415 + $0x258] sm:$0xf]
        %v1913 = vld [vmem:[%s415 + $0x25c] sm:$0xf]
        %v1914 = vld [vmem:[%s415 + $0x260] sm:$0xf]
        %v1915 = vld [vmem:[%s415 + $0x264] sm:$0xf]
        %v1916 = vld [vmem:[%s415 + $0x268] sm:$0xf]
        %v1917 = vld [vmem:[%s415 + $0x26c] sm:$0xf]
        %v1918 = vld [vmem:[%s415 + $0x270] sm:$0xf]
        %v1919 = vld [vmem:[%s415 + $0x274] sm:$0xf]
        %v1920 = vld [vmem:[%s415 + $0x278] sm:$0xf]
        %v1921 = vld [vmem:[%s415 + $0x27c] sm:$0xf]
        %v1922 = vld [vmem:[%s415 + $0x280] sm:$0xf]
        %v1923 = vld [vmem:[%s415 + $0x284] sm:$0xf]
        %v1924 = vld [vmem:[%s415 + $0x288] sm:$0xf]
        %v1925 = vld [vmem:[%s415 + $0x28c] sm:$0xf]
        %v1926 = vld [vmem:[%s415 + $0x290] sm:$0xf]
        %v1927 = vld [vmem:[%s415 + $0x294] sm:$0xf]
        %v1928 = vld [vmem:[%s415 + $0x298] sm:$0xf]
        %v1929 = vld [vmem:[%s415 + $0x29c] sm:$0xf]
        %v1930 = vld [vmem:[%s415 + $0x2a0] sm:$0xf]
        %v1931 = vld [vmem:[%s415 + $0x2a4] sm:$0xf]
        %v1932 = vld [vmem:[%s415 + $0x2a8] sm:$0xf]
        %v1933 = vld [vmem:[%s415 + $0x2ac] sm:$0xf]
        %v1934 = vld [vmem:[%s415 + $0x2b0] sm:$0xf]
        %v1935 = vld [vmem:[%s415 + $0x2b4] sm:$0xf]
        %v1936 = vld [vmem:[%s415 + $0x2b8] sm:$0xf]
        %v1937 = vld [vmem:[%s415 + $0x2bc] sm:$0xf]
        %v1938 = vld [vmem:[%s415 + $0x2c0] sm:$0xf]
        %v1939 = vld [vmem:[%s415 + $0x2c4] sm:$0xf]
        %v1940 = vld [vmem:[%s415 + $0x2c8] sm:$0xf]
        %v1941 = vld [vmem:[%s415 + $0x2cc] sm:$0xf]
        %v1942 = vld [vmem:[%s415 + $0x2d0] sm:$0xf]
        %v1943 = vld [vmem:[%s415 + $0x2d4] sm:$0xf]
        %v1944 = vld [vmem:[%s415 + $0x2d8] sm:$0xf]
        %v1945 = vld [vmem:[%s415 + $0x2dc] sm:$0xf]
        %v1946 = vld [vmem:[%s415 + $0x2e0] sm:$0xf]
        %v1947 = vld [vmem:[%s415 + $0x2e4] sm:$0xf]
        %v1948 = vld [vmem:[%s415 + $0x2e8] sm:$0xf]
        %v1949 = vld [vmem:[%s415 + $0x2ec] sm:$0xf]
        %v1950 = vld [vmem:[%s415 + $0x2f0] sm:$0xf]
        %v1951 = vld [vmem:[%s415 + $0x2f4] sm:$0xf]
        %v1952 = vld [vmem:[%s415 + $0x2f8] sm:$0xf]
        %v1953 = vld [vmem:[%s415 + $0x2fc] sm:$0xf]
        %v1954 = vld [vmem:[%s415 + $0x300] sm:$0xf]
        %v1955 = vld [vmem:[%s415 + $0x304] sm:$0xf]
        %v1956 = vld [vmem:[%s415 + $0x308] sm:$0xf]
        %v1957 = vld [vmem:[%s415 + $0x30c] sm:$0xf]
        %v1958 = vld [vmem:[%s415 + $0x310] sm:$0xf]
        %v1959 = vld [vmem:[%s415 + $0x314] sm:$0xf]
        %v1960 = vld [vmem:[%s415 + $0x318] sm:$0xf]
        %v1961 = vld [vmem:[%s415 + $0x31c] sm:$0xf]
        %v1962 = vld [vmem:[%s415 + $0x320] sm:$0xf]
        %v1963 = vld [vmem:[%s415 + $0x324] sm:$0xf]
        %v1964 = vld [vmem:[%s415 + $0x328] sm:$0xf]
        %v1965 = vld [vmem:[%s415 + $0x32c] sm:$0xf]
        %v1966 = vld [vmem:[%s415 + $0x330] sm:$0xf]
        %v1967 = vld [vmem:[%s415 + $0x334] sm:$0xf]
        %v1968 = vld [vmem:[%s415 + $0x338] sm:$0xf]
        %v1969 = vld [vmem:[%s415 + $0x33c] sm:$0xf]
        %v1970 = vld [vmem:[%s415 + $0x340] sm:$0xf]
        %v1971 = vld [vmem:[%s415 + $0x344] sm:$0xf]
        %v1972 = vld [vmem:[%s415 + $0x348] sm:$0xf]
        %v1973 = vld [vmem:[%s415 + $0x34c] sm:$0xf]
        %v1974 = vld [vmem:[%s415 + $0x350] sm:$0xf]
        %v1975 = vld [vmem:[%s415 + $0x354] sm:$0xf]
        %v1976 = vld [vmem:[%s415 + $0x358] sm:$0xf]
        %v1977 = vld [vmem:[%s415 + $0x35c] sm:$0xf]
        %v1978 = vld [vmem:[%s415 + $0x360] sm:$0xf]
        %v1979 = vld [vmem:[%s415 + $0x364] sm:$0xf]
        %v1980 = vld [vmem:[%s415 + $0x368] sm:$0xf]
        %v1981 = vld [vmem:[%s415 + $0x36c] sm:$0xf]
        %v1982 = vld [vmem:[%s415 + $0x370] sm:$0xf]
        %v1983 = vld [vmem:[%s415 + $0x374] sm:$0xf]
        %v1984 = vld [vmem:[%s415 + $0x378] sm:$0xf]
        %v1985 = vld [vmem:[%s415 + $0x37c] sm:$0xf]
        %v1986 = vld [vmem:[%s415 + $0x380] sm:$0xf]
        %v1987 = vld [vmem:[%s415 + $0x384] sm:$0xf]
        %v1988 = vld [vmem:[%s415 + $0x388] sm:$0xf]
        %v1989 = vld [vmem:[%s415 + $0x38c] sm:$0xf]
        %v1990 = vld [vmem:[%s415 + $0x390] sm:$0xf]
        %v1991 = vld [vmem:[%s415 + $0x394] sm:$0xf]
        %v1992 = vld [vmem:[%s415 + $0x398] sm:$0xf]
        %v1993 = vld [vmem:[%s415 + $0x39c] sm:$0xf]
        %v1994 = vld [vmem:[%s415 + $0x3a0] sm:$0xf]
        %v1995 = vld [vmem:[%s415 + $0x3a4] sm:$0xf]
        %v1996 = vld [vmem:[%s415 + $0x3a8] sm:$0xf]
        %v1997 = vld [vmem:[%s415 + $0x3ac] sm:$0xf]
        %v1998 = vld [vmem:[%s415 + $0x3b0] sm:$0xf]
        %v1999 = vld [vmem:[%s415 + $0x3b4] sm:$0xf]
        %v2000 = vld [vmem:[%s415 + $0x3b8] sm:$0xf]
        %v2001 = vld [vmem:[%s415 + $0x3bc] sm:$0xf]
        %v2002 = vld [vmem:[%s415 + $0x3c0] sm:$0xf]
        %v2003 = vld [vmem:[%s415 + $0x3c4] sm:$0xf]
        %v2004 = vld [vmem:[%s415 + $0x3c8] sm:$0xf]
        %v2005 = vld [vmem:[%s415 + $0x3cc] sm:$0xf]
        %v2006 = vld [vmem:[%s415 + $0x3d0] sm:$0xf]
        %v2007 = vld [vmem:[%s415 + $0x3d4] sm:$0xf]
        %v2008 = vld [vmem:[%s415 + $0x3d8] sm:$0xf]
        %v2009 = vld [vmem:[%s415 + $0x3dc] sm:$0xf]
        %v2010 = vld [vmem:[%s415 + $0x3e0] sm:$0xf]
        %v2011 = vld [vmem:[%s415 + $0x3e4] sm:$0xf]
        %v2012 = vld [vmem:[%s415 + $0x3e8] sm:$0xf]
        %v2013 = vld [vmem:[%s415 + $0x3ec] sm:$0xf]
        %v2014 = vld [vmem:[%s415 + $0x3f0] sm:$0xf]
        %v2015 = vld [vmem:[%s415 + $0x3f4] sm:$0xf]
        %v2016 = vld [vmem:[%s415 + $0x3f8] sm:$0xf]
        %v2017 = vld [vmem:[%s415 + $0x3fc] sm:$0xf]
        %v2018 = vlaneseq
        %v2019 = vshrl.u32 %v2018, 7
        %v2020 = vsub.s32 0, %v2019
        %v2021 = vrot.slane %v429, %v2020
        %v2278 = vunpack.c.l.b16 %v1762
        %v2279 = vunpack.c.l.b16 %v1763
        %v2280 = vunpack.c.l.b16 %v1764
        %v2281 = vunpack.c.l.b16 %v1765
        %v2282 = vunpack.c.l.b16 %v1766
        %v2283 = vunpack.c.l.b16 %v1767
        %v2284 = vunpack.c.l.b16 %v1768
        %v2285 = vunpack.c.l.b16 %v1769
        %v2286 = vunpack.c.l.b16 %v1770
        %v2287 = vunpack.c.l.b16 %v1771
        %v2288 = vunpack.c.l.b16 %v1772
        %v2289 = vunpack.c.l.b16 %v1773
        %v2290 = vunpack.c.l.b16 %v1774
        %v2291 = vunpack.c.l.b16 %v1775
        %v2292 = vunpack.c.l.b16 %v1776
        %v2293 = vunpack.c.l.b16 %v1777
        %v2294 = vunpack.c.l.b16 %v1778
        %v2295 = vunpack.c.l.b16 %v1779
        %v2296 = vunpack.c.l.b16 %v1780
        %v2297 = vunpack.c.l.b16 %v1781
        %v2298 = vunpack.c.l.b16 %v1782
        %v2299 = vunpack.c.l.b16 %v1783
        %v2300 = vunpack.c.l.b16 %v1784
        %v2301 = vunpack.c.l.b16 %v1785
        %v2302 = vunpack.c.l.b16 %v1786
        %v2303 = vunpack.c.l.b16 %v1787
        %v2304 = vunpack.c.l.b16 %v1788
        %v2305 = vunpack.c.l.b16 %v1789
        %v2306 = vunpack.c.l.b16 %v1790
        %v2307 = vunpack.c.l.b16 %v1791
        %v2308 = vunpack.c.l.b16 %v1792
        %v2309 = vunpack.c.l.b16 %v1793
        %v2310 = vunpack.c.l.b16 %v1794
        %v2311 = vunpack.c.l.b16 %v1795
        %v2312 = vunpack.c.l.b16 %v1796
        %v2313 = vunpack.c.l.b16 %v1797
        %v2314 = vunpack.c.l.b16 %v1798
        %v2315 = vunpack.c.l.b16 %v1799
        %v2316 = vunpack.c.l.b16 %v1800
        %v2317 = vunpack.c.l.b16 %v1801
        %v2318 = vunpack.c.l.b16 %v1802
        %v2319 = vunpack.c.l.b16 %v1803
        %v2320 = vunpack.c.l.b16 %v1804
        %v2321 = vunpack.c.l.b16 %v1805
        %v2322 = vunpack.c.l.b16 %v1806
        %v2323 = vunpack.c.l.b16 %v1807
        %v2324 = vunpack.c.l.b16 %v1808
        %v2325 = vunpack.c.l.b16 %v1809
        %v2326 = vunpack.c.l.b16 %v1810
        %v2327 = vunpack.c.l.b16 %v1811
        %v2328 = vunpack.c.l.b16 %v1812
        %v2329 = vunpack.c.l.b16 %v1813
        %v2330 = vunpack.c.l.b16 %v1814
        %v2331 = vunpack.c.l.b16 %v1815
        %v2332 = vunpack.c.l.b16 %v1816
        %v2333 = vunpack.c.l.b16 %v1817
        %v2334 = vunpack.c.l.b16 %v1818
        %v2335 = vunpack.c.l.b16 %v1819
        %v2336 = vunpack.c.l.b16 %v1820
        %v2337 = vunpack.c.l.b16 %v1821
        %v2338 = vunpack.c.l.b16 %v1822
        %v2339 = vunpack.c.l.b16 %v1823
        %v2340 = vunpack.c.l.b16 %v1824
        %v2341 = vunpack.c.l.b16 %v1825
        %v2342 = vunpack.c.l.b16 %v1826
        %v2343 = vunpack.c.l.b16 %v1827
        %v2344 = vunpack.c.l.b16 %v1828
        %v2345 = vunpack.c.l.b16 %v1829
        %v2346 = vunpack.c.l.b16 %v1830
        %v2347 = vunpack.c.l.b16 %v1831
        %v2348 = vunpack.c.l.b16 %v1832
        %v2349 = vunpack.c.l.b16 %v1833
        %v2350 = vunpack.c.l.b16 %v1834
        %v2351 = vunpack.c.l.b16 %v1835
        %v2352 = vunpack.c.l.b16 %v1836
        %v2353 = vunpack.c.l.b16 %v1837
        %v2354 = vunpack.c.l.b16 %v1838
        %v2355 = vunpack.c.l.b16 %v1839
        %v2356 = vunpack.c.l.b16 %v1840
        %v2357 = vunpack.c.l.b16 %v1841
        %v2358 = vunpack.c.l.b16 %v1842
        %v2359 = vunpack.c.l.b16 %v1843
        %v2360 = vunpack.c.l.b16 %v1844
        %v2361 = vunpack.c.l.b16 %v1845
        %v2362 = vunpack.c.l.b16 %v1846
        %v2363 = vunpack.c.l.b16 %v1847
        %v2364 = vunpack.c.l.b16 %v1848
        %v2365 = vunpack.c.l.b16 %v1849
        %v2366 = vunpack.c.l.b16 %v1850
        %v2367 = vunpack.c.l.b16 %v1851
        %v2368 = vunpack.c.l.b16 %v1852
        %v2369 = vunpack.c.l.b16 %v1853
        %v2370 = vunpack.c.l.b16 %v1854
        %v2371 = vunpack.c.l.b16 %v1855
        %v2372 = vunpack.c.l.b16 %v1856
        %v2373 = vunpack.c.l.b16 %v1857
        %v2374 = vunpack.c.l.b16 %v1858
        %v2375 = vunpack.c.l.b16 %v1859
        %v2376 = vunpack.c.l.b16 %v1860
        %v2377 = vunpack.c.l.b16 %v1861
        %v2378 = vunpack.c.l.b16 %v1862
        %v2379 = vunpack.c.l.b16 %v1863
        %v2380 = vunpack.c.l.b16 %v1864
        %v2381 = vunpack.c.l.b16 %v1865
        %v2382 = vunpack.c.l.b16 %v1866
        %v2383 = vunpack.c.l.b16 %v1867
        %v2384 = vunpack.c.l.b16 %v1868
        %v2385 = vunpack.c.l.b16 %v1869
        %v2386 = vunpack.c.l.b16 %v1870
        %v2387 = vunpack.c.l.b16 %v1871
        %v2388 = vunpack.c.l.b16 %v1872
        %v2389 = vunpack.c.l.b16 %v1873
        %v2390 = vunpack.c.l.b16 %v1874
        %v2391 = vunpack.c.l.b16 %v1875
        %v2392 = vunpack.c.l.b16 %v1876
        %v2393 = vunpack.c.l.b16 %v1877
        %v2394 = vunpack.c.l.b16 %v1878
        %v2395 = vunpack.c.l.b16 %v1879
        %v2396 = vunpack.c.l.b16 %v1880
        %v2397 = vunpack.c.l.b16 %v1881
        %v2398 = vunpack.c.l.b16 %v1882
        %v2399 = vunpack.c.l.b16 %v1883
        %v2400 = vunpack.c.l.b16 %v1884
        %v2401 = vunpack.c.l.b16 %v1885
        %v2402 = vunpack.c.l.b16 %v1886
        %v2403 = vunpack.c.l.b16 %v1887
        %v2404 = vunpack.c.l.b16 %v1888
        %v2405 = vunpack.c.l.b16 %v1889
        %v2406 = vunpack.c.l.b16 %v1890
        %v2407 = vunpack.c.l.b16 %v1891
        %v2408 = vunpack.c.l.b16 %v1892
        %v2409 = vunpack.c.l.b16 %v1893
        %v2410 = vunpack.c.l.b16 %v1894
        %v2411 = vunpack.c.l.b16 %v1895
        %v2412 = vunpack.c.l.b16 %v1896
        %v2413 = vunpack.c.l.b16 %v1897
        %v2414 = vunpack.c.l.b16 %v1898
        %v2415 = vunpack.c.l.b16 %v1899
        %v2416 = vunpack.c.l.b16 %v1900
        %v2417 = vunpack.c.l.b16 %v1901
        %v2418 = vunpack.c.l.b16 %v1902
        %v2419 = vunpack.c.l.b16 %v1903
        %v2420 = vunpack.c.l.b16 %v1904
        %v2421 = vunpack.c.l.b16 %v1905
        %v2422 = vunpack.c.l.b16 %v1906
        %v2423 = vunpack.c.l.b16 %v1907
        %v2424 = vunpack.c.l.b16 %v1908
        %v2425 = vunpack.c.l.b16 %v1909
        %v2426 = vunpack.c.l.b16 %v1910
        %v2427 = vunpack.c.l.b16 %v1911
        %v2428 = vunpack.c.l.b16 %v1912
        %v2429 = vunpack.c.l.b16 %v1913
        %v2430 = vunpack.c.l.b16 %v1914
        %v2431 = vunpack.c.l.b16 %v1915
        %v2432 = vunpack.c.l.b16 %v1916
        %v2433 = vunpack.c.l.b16 %v1917
        %v2434 = vunpack.c.l.b16 %v1918
        %v2435 = vunpack.c.l.b16 %v1919
        %v2436 = vunpack.c.l.b16 %v1920
        %v2437 = vunpack.c.l.b16 %v1921
        %v2438 = vunpack.c.l.b16 %v1922
        %v2439 = vunpack.c.l.b16 %v1923
        %v2440 = vunpack.c.l.b16 %v1924
        %v2441 = vunpack.c.l.b16 %v1925
        %v2442 = vunpack.c.l.b16 %v1926
        %v2443 = vunpack.c.l.b16 %v1927
        %v2444 = vunpack.c.l.b16 %v1928
        %v2445 = vunpack.c.l.b16 %v1929
        %v2446 = vunpack.c.l.b16 %v1930
        %v2447 = vunpack.c.l.b16 %v1931
        %v2448 = vunpack.c.l.b16 %v1932
        %v2449 = vunpack.c.l.b16 %v1933
        %v2450 = vunpack.c.l.b16 %v1934
        %v2451 = vunpack.c.l.b16 %v1935
        %v2452 = vunpack.c.l.b16 %v1936
        %v2453 = vunpack.c.l.b16 %v1937
        %v2454 = vunpack.c.l.b16 %v1938
        %v2455 = vunpack.c.l.b16 %v1939
        %v2456 = vunpack.c.l.b16 %v1940
        %v2457 = vunpack.c.l.b16 %v1941
        %v2458 = vunpack.c.l.b16 %v1942
        %v2459 = vunpack.c.l.b16 %v1943
        %v2460 = vunpack.c.l.b16 %v1944
        %v2461 = vunpack.c.l.b16 %v1945
        %v2462 = vunpack.c.l.b16 %v1946
        %v2463 = vunpack.c.l.b16 %v1947
        %v2464 = vunpack.c.l.b16 %v1948
        %v2465 = vunpack.c.l.b16 %v1949
        %v2466 = vunpack.c.l.b16 %v1950
        %v2467 = vunpack.c.l.b16 %v1951
        %v2468 = vunpack.c.l.b16 %v1952
        %v2469 = vunpack.c.l.b16 %v1953
        %v2470 = vunpack.c.l.b16 %v1954
        %v2471 = vunpack.c.l.b16 %v1955
        %v2472 = vunpack.c.l.b16 %v1956
        %v2473 = vunpack.c.l.b16 %v1957
        %v2474 = vunpack.c.l.b16 %v1958
        %v2475 = vunpack.c.l.b16 %v1959
        %v2476 = vunpack.c.l.b16 %v1960
        %v2477 = vunpack.c.l.b16 %v1961
        %v2478 = vunpack.c.l.b16 %v1962
        %v2479 = vunpack.c.l.b16 %v1963
        %v2480 = vunpack.c.l.b16 %v1964
        %v2481 = vunpack.c.l.b16 %v1965
        %v2482 = vunpack.c.l.b16 %v1966
        %v2483 = vunpack.c.l.b16 %v1967
        %v2484 = vunpack.c.l.b16 %v1968
        %v2485 = vunpack.c.l.b16 %v1969
        %v2486 = vunpack.c.l.b16 %v1970
        %v2487 = vunpack.c.l.b16 %v1971
        %v2488 = vunpack.c.l.b16 %v1972
        %v2489 = vunpack.c.l.b16 %v1973
        %v2490 = vunpack.c.l.b16 %v1974
        %v2491 = vunpack.c.l.b16 %v1975
        %v2492 = vunpack.c.l.b16 %v1976
        %v2493 = vunpack.c.l.b16 %v1977
        %v2494 = vunpack.c.l.b16 %v1978
        %v2495 = vunpack.c.l.b16 %v1979
        %v2496 = vunpack.c.l.b16 %v1980
        %v2497 = vunpack.c.l.b16 %v1981
        %v2498 = vunpack.c.l.b16 %v1982
        %v2499 = vunpack.c.l.b16 %v1983
        %v2500 = vunpack.c.l.b16 %v1984
        %v2501 = vunpack.c.l.b16 %v1985
        %v2502 = vunpack.c.l.b16 %v1986
        %v2503 = vunpack.c.l.b16 %v1987
        %v2504 = vunpack.c.l.b16 %v1988
        %v2505 = vunpack.c.l.b16 %v1989
        %v2506 = vunpack.c.l.b16 %v1990
        %v2507 = vunpack.c.l.b16 %v1991
        %v2508 = vunpack.c.l.b16 %v1992
        %v2509 = vunpack.c.l.b16 %v1993
        %v2510 = vunpack.c.l.b16 %v1994
        %v2511 = vunpack.c.l.b16 %v1995
        %v2512 = vunpack.c.l.b16 %v1996
        %v2513 = vunpack.c.l.b16 %v1997
        %v2514 = vunpack.c.l.b16 %v1998
        %v2515 = vunpack.c.l.b16 %v1999
        %v2516 = vunpack.c.l.b16 %v2000
        %v2517 = vunpack.c.l.b16 %v2001
        %v2518 = vunpack.c.l.b16 %v2002
        %v2519 = vunpack.c.l.b16 %v2003
        %v2520 = vunpack.c.l.b16 %v2004
        %v2521 = vunpack.c.l.b16 %v2005
        %v2522 = vunpack.c.l.b16 %v2006
        %v2523 = vunpack.c.l.b16 %v2007
        %v2524 = vunpack.c.l.b16 %v2008
        %v2525 = vunpack.c.l.b16 %v2009
        %v2526 = vunpack.c.l.b16 %v2010
        %v2527 = vunpack.c.l.b16 %v2011
        %v2528 = vunpack.c.l.b16 %v2012
        %v2529 = vunpack.c.l.b16 %v2013
        %v2530 = vunpack.c.l.b16 %v2014
        %v2531 = vunpack.c.l.b16 %v2015
        %v2532 = vunpack.c.l.b16 %v2016
        %v2533 = vunpack.c.l.b16 %v2017
        %v2534 = vpack.c.b16 %v2279, %v2278
        %v2535 = vpack.c.b16 %v2281, %v2280
        %v2536 = vpack.c.b16 %v2283, %v2282
        %v2537 = vpack.c.b16 %v2285, %v2284
        %v2538 = vpack.c.b16 %v2287, %v2286
        %v2539 = vpack.c.b16 %v2289, %v2288
        %v2540 = vpack.c.b16 %v2291, %v2290
        %v2541 = vpack.c.b16 %v2293, %v2292
        %v2542 = vpack.c.b16 %v2295, %v2294
        %v2543 = vpack.c.b16 %v2297, %v2296
        %v2544 = vpack.c.b16 %v2299, %v2298
        %v2545 = vpack.c.b16 %v2301, %v2300
        %v2546 = vpack.c.b16 %v2303, %v2302
        %v2547 = vpack.c.b16 %v2305, %v2304
        %v2548 = vpack.c.b16 %v2307, %v2306
        %v2549 = vpack.c.b16 %v2309, %v2308
        %v2550 = vpack.c.b16 %v2311, %v2310
        %v2551 = vpack.c.b16 %v2313, %v2312
        %v2552 = vpack.c.b16 %v2315, %v2314
        %v2553 = vpack.c.b16 %v2317, %v2316
        %v2554 = vpack.c.b16 %v2319, %v2318
        %v2555 = vpack.c.b16 %v2321, %v2320
        %v2556 = vpack.c.b16 %v2323, %v2322
        %v2557 = vpack.c.b16 %v2325, %v2324
        %v2558 = vpack.c.b16 %v2327, %v2326
        %v2559 = vpack.c.b16 %v2329, %v2328
        %v2560 = vpack.c.b16 %v2331, %v2330
        %v2561 = vpack.c.b16 %v2333, %v2332
        %v2562 = vpack.c.b16 %v2335, %v2334
        %v2563 = vpack.c.b16 %v2337, %v2336
        %v2564 = vpack.c.b16 %v2339, %v2338
        %v2565 = vpack.c.b16 %v2341, %v2340
        %v2566 = vpack.c.b16 %v2343, %v2342
        %v2567 = vpack.c.b16 %v2345, %v2344
        %v2568 = vpack.c.b16 %v2347, %v2346
        %v2569 = vpack.c.b16 %v2349, %v2348
        %v2570 = vpack.c.b16 %v2351, %v2350
        %v2571 = vpack.c.b16 %v2353, %v2352
        %v2572 = vpack.c.b16 %v2355, %v2354
        %v2573 = vpack.c.b16 %v2357, %v2356
        %v2574 = vpack.c.b16 %v2359, %v2358
        %v2575 = vpack.c.b16 %v2361, %v2360
        %v2576 = vpack.c.b16 %v2363, %v2362
        %v2577 = vpack.c.b16 %v2365, %v2364
        %v2578 = vpack.c.b16 %v2367, %v2366
        %v2579 = vpack.c.b16 %v2369, %v2368
        %v2580 = vpack.c.b16 %v2371, %v2370
        %v2581 = vpack.c.b16 %v2373, %v2372
        %v2582 = vpack.c.b16 %v2375, %v2374
        %v2583 = vpack.c.b16 %v2377, %v2376
        %v2584 = vpack.c.b16 %v2379, %v2378
        %v2585 = vpack.c.b16 %v2381, %v2380
        %v2586 = vpack.c.b16 %v2383, %v2382
        %v2587 = vpack.c.b16 %v2385, %v2384
        %v2588 = vpack.c.b16 %v2387, %v2386
        %v2589 = vpack.c.b16 %v2389, %v2388
        %v2590 = vpack.c.b16 %v2391, %v2390
        %v2591 = vpack.c.b16 %v2393, %v2392
        %v2592 = vpack.c.b16 %v2395, %v2394
        %v2593 = vpack.c.b16 %v2397, %v2396
        %v2594 = vpack.c.b16 %v2399, %v2398
        %v2595 = vpack.c.b16 %v2401, %v2400
        %v2596 = vpack.c.b16 %v2403, %v2402
        %v2597 = vpack.c.b16 %v2405, %v2404
        %v2598 = vpack.c.b16 %v2407, %v2406
        %v2599 = vpack.c.b16 %v2409, %v2408
        %v2600 = vpack.c.b16 %v2411, %v2410
        %v2601 = vpack.c.b16 %v2413, %v2412
        %v2602 = vpack.c.b16 %v2415, %v2414
        %v2603 = vpack.c.b16 %v2417, %v2416
        %v2604 = vpack.c.b16 %v2419, %v2418
        %v2605 = vpack.c.b16 %v2421, %v2420
        %v2606 = vpack.c.b16 %v2423, %v2422
        %v2607 = vpack.c.b16 %v2425, %v2424
        %v2608 = vpack.c.b16 %v2427, %v2426
        %v2609 = vpack.c.b16 %v2429, %v2428
        %v2610 = vpack.c.b16 %v2431, %v2430
        %v2611 = vpack.c.b16 %v2433, %v2432
        %v2612 = vpack.c.b16 %v2435, %v2434
        %v2613 = vpack.c.b16 %v2437, %v2436
        %v2614 = vpack.c.b16 %v2439, %v2438
        %v2615 = vpack.c.b16 %v2441, %v2440
        %v2616 = vpack.c.b16 %v2443, %v2442
        %v2617 = vpack.c.b16 %v2445, %v2444
        %v2618 = vpack.c.b16 %v2447, %v2446
        %v2619 = vpack.c.b16 %v2449, %v2448
        %v2620 = vpack.c.b16 %v2451, %v2450
        %v2621 = vpack.c.b16 %v2453, %v2452
        %v2622 = vpack.c.b16 %v2455, %v2454
        %v2623 = vpack.c.b16 %v2457, %v2456
        %v2624 = vpack.c.b16 %v2459, %v2458
        %v2625 = vpack.c.b16 %v2461, %v2460
        %v2626 = vpack.c.b16 %v2463, %v2462
        %v2627 = vpack.c.b16 %v2465, %v2464
        %v2628 = vpack.c.b16 %v2467, %v2466
        %v2629 = vpack.c.b16 %v2469, %v2468
        %v2630 = vpack.c.b16 %v2471, %v2470
        %v2631 = vpack.c.b16 %v2473, %v2472
        %v2632 = vpack.c.b16 %v2475, %v2474
        %v2633 = vpack.c.b16 %v2477, %v2476
        %v2634 = vpack.c.b16 %v2479, %v2478
        %v2635 = vpack.c.b16 %v2481, %v2480
        %v2636 = vpack.c.b16 %v2483, %v2482
        %v2637 = vpack.c.b16 %v2485, %v2484
        %v2638 = vpack.c.b16 %v2487, %v2486
        %v2639 = vpack.c.b16 %v2489, %v2488
        %v2640 = vpack.c.b16 %v2491, %v2490
        %v2641 = vpack.c.b16 %v2493, %v2492
        %v2642 = vpack.c.b16 %v2495, %v2494
        %v2643 = vpack.c.b16 %v2497, %v2496
        %v2644 = vpack.c.b16 %v2499, %v2498
        %v2645 = vpack.c.b16 %v2501, %v2500
        %v2646 = vpack.c.b16 %v2503, %v2502
        %v2647 = vpack.c.b16 %v2505, %v2504
        %v2648 = vpack.c.b16 %v2507, %v2506
        %v2649 = vpack.c.b16 %v2509, %v2508
        %v2650 = vpack.c.b16 %v2511, %v2510
        %v2651 = vpack.c.b16 %v2513, %v2512
        %v2652 = vpack.c.b16 %v2515, %v2514
        %v2653 = vpack.c.b16 %v2517, %v2516
        %v2654 = vpack.c.b16 %v2519, %v2518
        %v2655 = vpack.c.b16 %v2521, %v2520
        %v2656 = vpack.c.b16 %v2523, %v2522
        %v2657 = vpack.c.b16 %v2525, %v2524
        %v2658 = vpack.c.b16 %v2527, %v2526
        %v2659 = vpack.c.b16 %v2529, %v2528
        %v2660 = vpack.c.b16 %v2531, %v2530
        %v2661 = vpack.c.b16 %v2533, %v2532
        %2790 = vmatprep.subr.bf16.mxu0 0
        %2791 = vmatpush1.bf16.msra.mxu0 %v2534
        %2792 = vmatprep.subr.bf16.mxu0 0
        %2793 = vmatpush1.bf16.msra.mxu0 %v2535
        %2794 = vmatprep.subr.bf16.mxu0 0
        %2795 = vmatpush1.bf16.msra.mxu0 %v2536
        %2796 = vmatprep.subr.bf16.mxu0 0
        %2797 = vmatpush1.bf16.msra.mxu0 %v2537
        %2798 = vmatprep.subr.bf16.mxu0 0
        %2799 = vmatpush1.bf16.msra.mxu0 %v2538
        %2800 = vmatprep.subr.bf16.mxu0 0
        %2801 = vmatpush1.bf16.msra.mxu0 %v2539
        %2802 = vmatprep.subr.bf16.mxu0 0
        %2803 = vmatpush1.bf16.msra.mxu0 %v2540
        %2804 = vmatprep.subr.bf16.mxu0 0
        %2805 = vmatpush1.bf16.msra.mxu0 %v2541
        %2806 = vmatprep.subr.bf16.mxu0 0
        %2807 = vmatpush1.bf16.msra.mxu0 %v2542
        %2808 = vmatprep.subr.bf16.mxu0 0
        %2809 = vmatpush1.bf16.msra.mxu0 %v2543
        %2810 = vmatprep.subr.bf16.mxu0 0
        %2811 = vmatpush1.bf16.msra.mxu0 %v2544
        %2812 = vmatprep.subr.bf16.mxu0 0
        %2813 = vmatpush1.bf16.msra.mxu0 %v2545
        %2814 = vmatprep.subr.bf16.mxu0 0
        %2815 = vmatpush1.bf16.msra.mxu0 %v2546
        %2816 = vmatprep.subr.bf16.mxu0 0
        %2817 = vmatpush1.bf16.msra.mxu0 %v2547
        %2818 = vmatprep.subr.bf16.mxu0 0
        %2819 = vmatpush1.bf16.msra.mxu0 %v2548
        %2820 = vmatprep.subr.bf16.mxu0 0
        %2821 = vmatpush1.bf16.msra.mxu0 %v2549
        %2822 = vmatprep.mubr.bf16.mxu0 %v1747
        %2823 = vmatmul.mubr.bf16.gmra.mrb[0].mxu0 %v1746
        %v2824 = vpop.f32.mrb[0].mxu0
        %v2825 = vadd.f32 %v2021, %v2824
        %v2826 = vpop.f32.mrb[0].mxu0
        %v2827 = vpop.f32.mrb[0].mxu0
        %v2828 = vadd.f32 %v2021, %v2827
        %v2829 = vpop.f32.mrb[0].mxu0
        %2830 = vdwg.mxu0
        %2831 = vmatprep.subr.bf16.mxu0 0
        %2832 = vmatpush1.bf16.msra.mxu0 %v2550
        %2833 = vmatprep.subr.bf16.mxu0 0
        %2834 = vmatpush1.bf16.msra.mxu0 %v2551
        %2835 = vmatprep.subr.bf16.mxu0 0
        %2836 = vmatpush1.bf16.msra.mxu0 %v2552
        %2837 = vmatprep.subr.bf16.mxu0 0
        %2838 = vmatpush1.bf16.msra.mxu0 %v2553
        %2839 = vmatprep.subr.bf16.mxu0 0
        %2840 = vmatpush1.bf16.msra.mxu0 %v2554
        %2841 = vmatprep.subr.bf16.mxu0 0
        %2842 = vmatpush1.bf16.msra.mxu0 %v2555
        %2843 = vmatprep.subr.bf16.mxu0 0
        %2844 = vmatpush1.bf16.msra.mxu0 %v2556
        %2845 = vmatprep.subr.bf16.mxu0 0
        %2846 = vmatpush1.bf16.msra.mxu0 %v2557
        %2847 = vmatprep.subr.bf16.mxu0 0
        %2848 = vmatpush1.bf16.msra.mxu0 %v2558
        %2849 = vmatprep.subr.bf16.mxu0 0
        %2850 = vmatpush1.bf16.msra.mxu0 %v2559
        %2851 = vmatprep.subr.bf16.mxu0 0
        %2852 = vmatpush1.bf16.msra.mxu0 %v2560
        %2853 = vmatprep.subr.bf16.mxu0 0
        %2854 = vmatpush1.bf16.msra.mxu0 %v2561
        %2855 = vmatprep.subr.bf16.mxu0 0
        %2856 = vmatpush1.bf16.msra.mxu0 %v2562
        %2857 = vmatprep.subr.bf16.mxu0 0
        %2858 = vmatpush1.bf16.msra.mxu0 %v2563
        %2859 = vmatprep.subr.bf16.mxu0 0
        %2860 = vmatpush1.bf16.msra.mxu0 %v2564
        %2861 = vmatprep.subr.bf16.mxu0 0
        %2862 = vmatpush1.bf16.msra.mxu0 %v2565
        %2863 = vmatprep.mubr.bf16.mxu0 %v1749
        %2864 = vmatmul.mubr.bf16.gmra.mrb[0].mxu0 %v1748
        %v2865 = vpop.f32.mrb[0].mxu0
        %v2866 = vadd.f32 %v2825, %v2865
        %v2867 = vpop.f32.mrb[0].mxu0
        %v2868 = vpop.f32.mrb[0].mxu0
        %v2869 = vadd.f32 %v2828, %v2868
        %v2870 = vpop.f32.mrb[0].mxu0
        %2871 = vdwg.mxu0
        %2872 = vmatprep.subr.bf16.mxu0 0
        %2873 = vmatpush1.bf16.msra.mxu0 %v2566
        %2874 = vmatprep.subr.bf16.mxu0 0
        %2875 = vmatpush1.bf16.msra.mxu0 %v2567
        %2876 = vmatprep.subr.bf16.mxu0 0
        %2877 = vmatpush1.bf16.msra.mxu0 %v2568
        %2878 = vmatprep.subr.bf16.mxu0 0
        %2879 = vmatpush1.bf16.msra.mxu0 %v2569
        %2880 = vmatprep.subr.bf16.mxu0 0
        %2881 = vmatpush1.bf16.msra.mxu0 %v2570
        %2882 = vmatprep.subr.bf16.mxu0 0
        %2883 = vmatpush1.bf16.msra.mxu0 %v2571
        %2884 = vmatprep.subr.bf16.mxu0 0
        %2885 = vmatpush1.bf16.msra.mxu0 %v2572
        %2886 = vmatprep.subr.bf16.mxu0 0
        %2887 = vmatpush1.bf16.msra.mxu0 %v2573
        %2888 = vmatprep.subr.bf16.mxu0 0
        %2889 = vmatpush1.bf16.msra.mxu0 %v2574
        %2890 = vmatprep.subr.bf16.mxu0 0
        %2891 = vmatpush1.bf16.msra.mxu0 %v2575
        %2892 = vmatprep.subr.bf16.mxu0 0
        %2893 = vmatpush1.bf16.msra.mxu0 %v2576
        %2894 = vmatprep.subr.bf16.mxu0 0
        %2895 = vmatpush1.bf16.msra.mxu0 %v2577
        %2896 = vmatprep.subr.bf16.mxu0 0
        %2897 = vmatpush1.bf16.msra.mxu0 %v2578
        %2898 = vmatprep.subr.bf16.mxu0 0
        %2899 = vmatpush1.bf16.msra.mxu0 %v2579
        %2900 = vmatprep.subr.bf16.mxu0 0
        %2901 = vmatpush1.bf16.msra.mxu0 %v2580
        %2902 = vmatprep.subr.bf16.mxu0 0
        %2903 = vmatpush1.bf16.msra.mxu0 %v2581
        %2904 = vmatprep.mubr.bf16.mxu0 %v1751
        %2905 = vmatmul.mubr.bf16.gmra.mrb[0].mxu0 %v1750
        %v2906 = vpop.f32.mrb[0].mxu0
        %v2907 = vadd.f32 %v2866, %v2906
        %v2908 = vpop.f32.mrb[0].mxu0
        %v2909 = vpop.f32.mrb[0].mxu0
        %v2910 = vadd.f32 %v2869, %v2909
        %v2911 = vpop.f32.mrb[0].mxu0
        %2912 = vdwg.mxu0
        %2913 = vmatprep.subr.bf16.mxu0 0
        %2914 = vmatpush1.bf16.msra.mxu0 %v2582
        %2915 = vmatprep.subr.bf16.mxu0 0
        %2916 = vmatpush1.bf16.msra.mxu0 %v2583
        %2917 = vmatprep.subr.bf16.mxu0 0
        %2918 = vmatpush1.bf16.msra.mxu0 %v2584
        %2919 = vmatprep.subr.bf16.mxu0 0
        %2920 = vmatpush1.bf16.msra.mxu0 %v2585
        %2921 = vmatprep.subr.bf16.mxu0 0
        %2922 = vmatpush1.bf16.msra.mxu0 %v2586
        %2923 = vmatprep.subr.bf16.mxu0 0
        %2924 = vmatpush1.bf16.msra.mxu0 %v2587
        %2925 = vmatprep.subr.bf16.mxu0 0
        %2926 = vmatpush1.bf16.msra.mxu0 %v2588
        %2927 = vmatprep.subr.bf16.mxu0 0
        %2928 = vmatpush1.bf16.msra.mxu0 %v2589
        %2929 = vmatprep.subr.bf16.mxu0 0
        %2930 = vmatpush1.bf16.msra.mxu0 %v2590
        %2931 = vmatprep.subr.bf16.mxu0 0
        %2932 = vmatpush1.bf16.msra.mxu0 %v2591
        %2933 = vmatprep.subr.bf16.mxu0 0
        %2934 = vmatpush1.bf16.msra.mxu0 %v2592
        %2935 = vmatprep.subr.bf16.mxu0 0
        %2936 = vmatpush1.bf16.msra.mxu0 %v2593
        %2937 = vmatprep.subr.bf16.mxu0 0
        %2938 = vmatpush1.bf16.msra.mxu0 %v2594
        %2939 = vmatprep.subr.bf16.mxu0 0
        %2940 = vmatpush1.bf16.msra.mxu0 %v2595
        %2941 = vmatprep.subr.bf16.mxu0 0
        %2942 = vmatpush1.bf16.msra.mxu0 %v2596
        %2943 = vmatprep.subr.bf16.mxu0 0
        %2944 = vmatpush1.bf16.msra.mxu0 %v2597
        %2945 = vmatprep.mubr.bf16.mxu0 %v1753
        %2946 = vmatmul.mubr.bf16.gmra.mrb[0].mxu0 %v1752
        %v2947 = vpop.f32.mrb[0].mxu0
        %v2948 = vadd.f32 %v2907, %v2947
        %v2949 = vpop.f32.mrb[0].mxu0
        %v2950 = vpop.f32.mrb[0].mxu0
        %v2951 = vadd.f32 %v2910, %v2950
        %v2952 = vpop.f32.mrb[0].mxu0
        %2953 = vdwg.mxu0
        %2954 = vmatprep.subr.bf16.mxu0 0
        %2955 = vmatpush1.bf16.msra.mxu0 %v2598
        %2956 = vmatprep.subr.bf16.mxu0 0
        %2957 = vmatpush1.bf16.msra.mxu0 %v2599
        %2958 = vmatprep.subr.bf16.mxu0 0
        %2959 = vmatpush1.bf16.msra.mxu0 %v2600
        %2960 = vmatprep.subr.bf16.mxu0 0
        %2961 = vmatpush1.bf16.msra.mxu0 %v2601
        %2962 = vmatprep.subr.bf16.mxu0 0
        %2963 = vmatpush1.bf16.msra.mxu0 %v2602
        %2964 = vmatprep.subr.bf16.mxu0 0
        %2965 = vmatpush1.bf16.msra.mxu0 %v2603
        %2966 = vmatprep.subr.bf16.mxu0 0
        %2967 = vmatpush1.bf16.msra.mxu0 %v2604
        %2968 = vmatprep.subr.bf16.mxu0 0
        %2969 = vmatpush1.bf16.msra.mxu0 %v2605
        %2970 = vmatprep.subr.bf16.mxu0 0
        %2971 = vmatpush1.bf16.msra.mxu0 %v2606
        %2972 = vmatprep.subr.bf16.mxu0 0
        %2973 = vmatpush1.bf16.msra.mxu0 %v2607
        %2974 = vmatprep.subr.bf16.mxu0 0
        %2975 = vmatpush1.bf16.msra.mxu0 %v2608
        %2976 = vmatprep.subr.bf16.mxu0 0
        %2977 = vmatpush1.bf16.msra.mxu0 %v2609
        %2978 = vmatprep.subr.bf16.mxu0 0
        %2979 = vmatpush1.bf16.msra.mxu0 %v2610
        %2980 = vmatprep.subr.bf16.mxu0 0
        %2981 = vmatpush1.bf16.msra.mxu0 %v2611
        %2982 = vmatprep.subr.bf16.mxu0 0
        %2983 = vmatpush1.bf16.msra.mxu0 %v2612
        %2984 = vmatprep.subr.bf16.mxu0 0
        %2985 = vmatpush1.bf16.msra.mxu0 %v2613
        %2986 = vmatprep.mubr.bf16.mxu0 %v1755
        %2987 = vmatmul.mubr.bf16.gmra.mrb[0].mxu0 %v1754
        %v2988 = vpop.f32.mrb[0].mxu0
        %v2989 = vadd.f32 %v2948, %v2988
        %v2990 = vpop.f32.mrb[0].mxu0
        %v2991 = vpop.f32.mrb[0].mxu0
        %v2992 = vadd.f32 %v2951, %v2991
        %v2993 = vpop.f32.mrb[0].mxu0
        %2994 = vdwg.mxu0
        %2995 = vmatprep.subr.bf16.mxu0 0
        %2996 = vmatpush1.bf16.msra.mxu0 %v2614
        %2997 = vmatprep.subr.bf16.mxu0 0
        %2998 = vmatpush1.bf16.msra.mxu0 %v2615
        %2999 = vmatprep.subr.bf16.mxu0 0
        %3000 = vmatpush1.bf16.msra.mxu0 %v2616
        %3001 = vmatprep.subr.bf16.mxu0 0
        %3002 = vmatpush1.bf16.msra.mxu0 %v2617
        %3003 = vmatprep.subr.bf16.mxu0 0
        %3004 = vmatpush1.bf16.msra.mxu0 %v2618
        %3005 = vmatprep.subr.bf16.mxu0 0
        %3006 = vmatpush1.bf16.msra.mxu0 %v2619
        %3007 = vmatprep.subr.bf16.mxu0 0
        %3008 = vmatpush1.bf16.msra.mxu0 %v2620
        %3009 = vmatprep.subr.bf16.mxu0 0
        %3010 = vmatpush1.bf16.msra.mxu0 %v2621
        %3011 = vmatprep.subr.bf16.mxu0 0
        %3012 = vmatpush1.bf16.msra.mxu0 %v2622
        %3013 = vmatprep.subr.bf16.mxu0 0
        %3014 = vmatpush1.bf16.msra.mxu0 %v2623
        %3015 = vmatprep.subr.bf16.mxu0 0
        %3016 = vmatpush1.bf16.msra.mxu0 %v2624
        %3017 = vmatprep.subr.bf16.mxu0 0
        %3018 = vmatpush1.bf16.msra.mxu0 %v2625
        %3019 = vmatprep.subr.bf16.mxu0 0
        %3020 = vmatpush1.bf16.msra.mxu0 %v2626
        %3021 = vmatprep.subr.bf16.mxu0 0
        %3022 = vmatpush1.bf16.msra.mxu0 %v2627
        %3023 = vmatprep.subr.bf16.mxu0 0
        %3024 = vmatpush1.bf16.msra.mxu0 %v2628
        %3025 = vmatprep.subr.bf16.mxu0 0
        %3026 = vmatpush1.bf16.msra.mxu0 %v2629
        %3027 = vmatprep.mubr.bf16.mxu0 %v1757
        %3028 = vmatmul.mubr.bf16.gmra.mrb[0].mxu0 %v1756
        %v3029 = vpop.f32.mrb[0].mxu0
        %v3030 = vadd.f32 %v2989, %v3029
        %v3031 = vpop.f32.mrb[0].mxu0
        %v3032 = vpop.f32.mrb[0].mxu0
        %v3033 = vadd.f32 %v2992, %v3032
        %v3034 = vpop.f32.mrb[0].mxu0
        %3035 = vdwg.mxu0
        %3036 = vmatprep.subr.bf16.mxu0 0
        %3037 = vmatpush1.bf16.msra.mxu0 %v2630
        %3038 = vmatprep.subr.bf16.mxu0 0
        %3039 = vmatpush1.bf16.msra.mxu0 %v2631
        %3040 = vmatprep.subr.bf16.mxu0 0
        %3041 = vmatpush1.bf16.msra.mxu0 %v2632
        %3042 = vmatprep.subr.bf16.mxu0 0
        %3043 = vmatpush1.bf16.msra.mxu0 %v2633
        %3044 = vmatprep.subr.bf16.mxu0 0
        %3045 = vmatpush1.bf16.msra.mxu0 %v2634
        %3046 = vmatprep.subr.bf16.mxu0 0
        %3047 = vmatpush1.bf16.msra.mxu0 %v2635
        %3048 = vmatprep.subr.bf16.mxu0 0
        %3049 = vmatpush1.bf16.msra.mxu0 %v2636
        %3050 = vmatprep.subr.bf16.mxu0 0
        %3051 = vmatpush1.bf16.msra.mxu0 %v2637
        %3052 = vmatprep.subr.bf16.mxu0 0
        %3053 = vmatpush1.bf16.msra.mxu0 %v2638
        %3054 = vmatprep.subr.bf16.mxu0 0
        %3055 = vmatpush1.bf16.msra.mxu0 %v2639
        %3056 = vmatprep.subr.bf16.mxu0 0
        %3057 = vmatpush1.bf16.msra.mxu0 %v2640
        %3058 = vmatprep.subr.bf16.mxu0 0
        %3059 = vmatpush1.bf16.msra.mxu0 %v2641
        %3060 = vmatprep.subr.bf16.mxu0 0
        %3061 = vmatpush1.bf16.msra.mxu0 %v2642
        %3062 = vmatprep.subr.bf16.mxu0 0
        %3063 = vmatpush1.bf16.msra.mxu0 %v2643
        %3064 = vmatprep.subr.bf16.mxu0 0
        %3065 = vmatpush1.bf16.msra.mxu0 %v2644
        %3066 = vmatprep.subr.bf16.mxu0 0
        %3067 = vmatpush1.bf16.msra.mxu0 %v2645
        %3068 = vmatprep.mubr.bf16.mxu0 %v1759
        %3069 = vmatmul.mubr.bf16.gmra.mrb[0].mxu0 %v1758
        %v3070 = vpop.f32.mrb[0].mxu0
        %v3071 = vadd.f32 %v3030, %v3070
        %v3072 = vpop.f32.mrb[0].mxu0
        %v3073 = vpop.f32.mrb[0].mxu0
        %v3074 = vadd.f32 %v3033, %v3073
        %v3075 = vpop.f32.mrb[0].mxu0
        %3076 = vdwg.mxu0
        %3077 = vmatprep.subr.bf16.mxu0 0
        %3078 = vmatpush1.bf16.msra.mxu0 %v2646
        %3079 = vmatprep.subr.bf16.mxu0 0
        %3080 = vmatpush1.bf16.msra.mxu0 %v2647
        %3081 = vmatprep.subr.bf16.mxu0 0
        %3082 = vmatpush1.bf16.msra.mxu0 %v2648
        %3083 = vmatprep.subr.bf16.mxu0 0
        %3084 = vmatpush1.bf16.msra.mxu0 %v2649
        %3085 = vmatprep.subr.bf16.mxu0 0
        %3086 = vmatpush1.bf16.msra.mxu0 %v2650
        %3087 = vmatprep.subr.bf16.mxu0 0
        %3088 = vmatpush1.bf16.msra.mxu0 %v2651
        %3089 = vmatprep.subr.bf16.mxu0 0
        %3090 = vmatpush1.bf16.msra.mxu0 %v2652
        %3091 = vmatprep.subr.bf16.mxu0 0
        %3092 = vmatpush1.bf16.msra.mxu0 %v2653
        %3093 = vmatprep.subr.bf16.mxu0 0
        %3094 = vmatpush1.bf16.msra.mxu0 %v2654
        %3095 = vmatprep.subr.bf16.mxu0 0
        %3096 = vmatpush1.bf16.msra.mxu0 %v2655
        %3097 = vmatprep.subr.bf16.mxu0 0
        %3098 = vmatpush1.bf16.msra.mxu0 %v2656
        %3099 = vmatprep.subr.bf16.mxu0 0
        %3100 = vmatpush1.bf16.msra.mxu0 %v2657
        %3101 = vmatprep.subr.bf16.mxu0 0
        %3102 = vmatpush1.bf16.msra.mxu0 %v2658
        %3103 = vmatprep.subr.bf16.mxu0 0
        %3104 = vmatpush1.bf16.msra.mxu0 %v2659
        %3105 = vmatprep.subr.bf16.mxu0 0
        %3106 = vmatpush1.bf16.msra.mxu0 %v2660
        %3107 = vmatprep.subr.bf16.mxu0 0
        %3108 = vmatpush1.bf16.msra.mxu0 %v2661
        %3109 = vmatprep.mubr.bf16.mxu0 %v1761
        %3110 = vmatmul.mubr.bf16.gmra.mrb[0].mxu0 %v1760
        %v3111 = vpop.f32.mrb[0].mxu0
        %v3112 = vadd.f32 %v3071, %v3111
        %v3113 = vpop.f32.mrb[0].mxu0
        %v3114 = vpop.f32.mrb[0].mxu0
        %v3115 = vadd.f32 %v3074, %v3114
        %v3116 = vpop.f32.mrb[0].mxu0
        %3117 = vdwg.mxu0
        %v3118 = vadd.f32 %v1088, %v3112
        %v3119 = vadd.f32 %v1089, %v3115
        %v3120 = vsel %vm434, %v3118, 0.0
        %3121 = vadd.xlane.f32.xlu0 %v3120
        %v3122 = vpop.xlane.xlu0 %3121
        %v3123 = vsel %vm434, %v3119, 0.0
        %3124 = vadd.xlane.f32.xlu0 %v3123
        %v3125 = vpop.xlane.xlu0 %3124
        %v3126 = vmul.f32 %v3122, 0.03125
        %v3127 = vmul.f32 %v3125, 0.03125
        %v3128 = vsub.f32 %v3118, %v3126
        %v3129 = vsub.f32 %v3119, %v3127
        %v3130 = vmul.f32 %v3128, %v3128
        %v3131 = vmul.f32 %v3129, %v3129
        %v3132 = vsel %vm434, %v3130, 0.0
        %3133 = vadd.xlane.f32.xlu0 %v3132
        %v3134 = vpop.xlane.xlu0 %3133
        %v3135 = vsel %vm434, %v3131, 0.0
        %3136 = vadd.xlane.f32.xlu0 %v3135
        %v3137 = vpop.xlane.xlu0 %3136
        %v3138 = vmul.f32 %v3134, 0.03125
        %v3139 = vmul.f32 %v3137, 0.03125
        %v3140 = vadd.f32 %v3138, 1e-05
        %v3141 = vadd.f32 %v3139, 1e-05
        %v3142 = vrsqrt.pop %v3140
        %v3143 = vrsqrt.pop %v3141
        %v3144 = vmul.f32 %v3128, %v3142
        %v3145 = vmul.f32 %v3129, %v3143
        %v3146 = vlaneseq
        %v3147 = vshrl.u32 %v3146, 7
        %v3148 = vsub.s32 6, %v3147
        %v3149 = vrot.slane %v428, %v3148
        %v3150 = vmul.f32 %v3144, %v3149
        %v3151 = vmul.f32 %v3145, %v3149
        %v3152 = vlaneseq
        %v3153 = vshrl.u32 %v3152, 7
        %v3154 = vsub.s32 7, %v3153
        %v3155 = vrot.slane %v428, %v3154
        %v3156 = vadd.f32 %v3150, %v3155
        %v3157 = vadd.f32 %v3151, %v3155
        %3158 = vst.msk [vmem:[#allocation2] sm:$0xff] %vm434, %v3156
        %3159 = vst.msk [vmem:[#allocation2 + $0x8] sm:$0xff] %vm434, %v3157
        // Predicated region
        $region61: #{simple_transformer_forward.1} parent=55 // pred_check
          %p3160 = pneg %p253
        $region62: #{simple_transformer_forward.1} parent=55 // pred_check_branch
          %3162 = sbr.rel (%p3160) target = $region64
        $region63: #{simple_transformer_forward.1} parent=55 // pred_region
          %s3164 = ssub.s32 256, 256
          %3165 = vsyncadd [#allocation3], %s3164
          %s3166 = sshll.u32 [#allocation2], 4
          %s3167 = int_to_ptr.vmem [resolvable:$true] %s3166
          %3172 = dma.vmem_to_hbm [thread:$0]  %s3167, 256, %s9, [#allocation3], 128, 128, 8
        $region64: #{simple_transformer_forward.1} parent=55 // pred_fallthru
          _
        // Predicated region
        $region65: #{simple_transformer_forward.1} parent=55 // pred_check
          %p3173 = pneg %p253
        $region66: #{simple_transformer_forward.1} parent=55 // pred_check_branch
          %3175 = sbr.rel (%p3173) target = $region68
        $region67: #{simple_transformer_forward.1} parent=55 // pred_region
          %3176 = dma.done [#allocation3], 256
        $region68: #{simple_transformer_forward.1} parent=55 // pred_fallthru
          _
      $region56: #{simple_transformer_forward.1} parent=5 // pred_fallthru
        _
      %p3177 = scmp.le.s32.totalorder 2, %s16
      // Predicated region
      $region69: #{simple_transformer_forward.1} parent=5 // pred_check
        %p3178 = pneg %p3177
      $region70: #{simple_transformer_forward.1} parent=5 // pred_check_branch
        %3180 = sbr.rel (%p3178) target = $region72
      $region71: #{simple_transformer_forward.1} parent=5 // pred_region
        %s3181 = ssub.s32 %s16, 2
      $region72: #{simple_transformer_forward.1} parent=5 // pred_fallthru
        _
    $region6: #{simple_transformer_forward.1} parent=1 // loop_footer
      %s20 = sadd.s32 1, %s16
    $region7: #{simple_transformer_forward.1} parent=1 // loop_footer_branch
      %15 = sbr.rel target = $region3
    $region8: #{simple_transformer_forward.1} parent=1 // loop_exit
      _
    %3182 = vsyncpa [#allocation3], 1
    %s3183 = scalar_lea.sflag [#allocation3], 1
    %3184 = vsyncpa %s3183, 1

</llo_original>
